<compile_context>
chip_gen: v5e
topology: v5e:2x2
jax: 0.10.0
libtpu: 0.0.40
codegen_flags: <defaults>
</compile_context>

<pallas_src>
import functools
from math import sqrt

import jax
import jax.numpy as jnp
from jax.experimental import pallas as pl
from jax.experimental.pallas import tpu as pltpu

LANE = 128


def _round_up(x, m):
    return (x + m - 1) // m * m


def _pick_row_tile(h_out, w_out):
    """Smallest divisor of h_out whose tile has >=128 output rows (MXU M-tile),
    which also maximizes the number of parallel row-tiles."""
    for th in range(1, h_out + 1):
        if h_out % th == 0 and th * w_out >= 128:
            return th
    return h_out


def _conv_lrelu_kernel(x_hbm, w_ref, b_ref, o_ref, xwin, sem, *,
                       K, TH, W_out, slope):
    """One (batch, row-tile) step of conv2d + bias + LeakyReLU.

    x_hbm : (N, H_pad, W_pad, Cp)   full padded input, left in HBM (pl.ANY)
    w_ref : (K*K, Cp, Fp)           EqualLR-scaled weights, VMEM resident
    b_ref : (1, Fp)                 bias, VMEM resident
    o_ref : (1, TH, W_out, Fp)      output row tile, VMEM (auto-pipelined)
    xwin  : (TH+K-1, W_pad, Cp)     VMEM scratch: input row window incl. halo
    sem   : (1,) DMA semaphore
    """
    b = pl.program_id(0)
    t = pl.program_id(1)
    rows = TH + K - 1
    row0 = pl.multiple_of(t * TH, TH)

    # TODO(synk): double-buffer this window DMA across grid steps (P4 /
    # emit_pipeline) to hide the input fetch behind the previous tile's matmuls.
    copy = pltpu.make_async_copy(x_hbm.at[b, pl.ds(row0, rows)], xwin, sem.at[0])
    copy.start()
    copy.wait()

    c_in = xwin.shape[-1]      # padded to a multiple of 128
    f_out = o_ref.shape[-1]    # padded to a multiple of 128

    acc = jnp.zeros((TH * W_out, f_out), dtype=jnp.float32)
    # K is static -> fully unrolled. Each tap is a dense (TH*W_out, Cp)x(Cp, Fp)
    # MXU matmul with full (>=128) contraction depth.
    for kh in range(K):
        for kw in range(K):
            patch = xwin[kh:kh + TH, kw:kw + W_out, :]
            patch = patch.reshape(TH * W_out, c_in)
            acc = acc + jnp.dot(patch, w_ref[kh * K + kw],
                                preferred_element_type=jnp.float32)

    # Epilogue (once per tile): bias + LeakyReLU(0.2) + cast, lane-dense store.
    acc = acc + b_ref[...]
    acc = jnp.where(acc >= 0.0, acc, slope * acc)
    o_ref[0] = acc.reshape(TH, W_out, f_out).astype(o_ref.dtype)


def _equal_conv2d_lrelu(x_nhwc, weight, bias, pad, slope):
    """EqualConv2d + LeakyReLU on a channel-padded NHWC tensor.

    x_nhwc : (N, H, W, Cp), Cp a multiple of 128 (extra channels are ignored
             via zero weight padding).
    weight : (F, C, k, k) raw torch-layout weight (unscaled).
    bias   : (F,)
    Returns (N, H_out, W_out, Fp), Fp = round_up(F, 128); padded output
    channels are exactly zero (zero weights + zero bias, LeakyReLU(0)=0).
    """
    n, h, w, cpad = x_nhwc.shape
    f, c, kh, kw = weight.shape
    assert kh == kw, "square kernels only"
    k = kh
    assert c <= cpad
    fpad = _round_up(f, LANE)

    # EqualLR scaling (fan_in = C * k * k); layout (k,k,C,F) -> (k*k, Cp, Fp).
    mult = sqrt(2.0 / (c * k * k))
    wk = jnp.transpose(weight.astype(jnp.float32) * mult, (2, 3, 1, 0))
    wk = jnp.pad(wk, ((0, 0), (0, 0), (0, cpad - c), (0, fpad - f)))
    wk = wk.reshape(k * k, cpad, fpad)
    bp = jnp.pad(bias.astype(jnp.float32), (0, fpad - f)).reshape(1, fpad)

    # Spatial halo pad only (one-time, tiny); no dilation / no 4x inflation.
    xp = jnp.pad(x_nhwc, ((0, 0), (pad, pad), (pad, pad), (0, 0)))
    h_pad, w_pad = h + 2 * pad, w + 2 * pad
    h_out, w_out = h_pad - k + 1, w_pad - k + 1
    assert h_out > 0 and w_out > 0

    th = _pick_row_tile(h_out, w_out)
    rows = th + k - 1

    kernel = functools.partial(_conv_lrelu_kernel, K=k, TH=th, W_out=w_out,
                               slope=slope)

    return pl.pallas_call(
        kernel,
        out_shape=jax.ShapeDtypeStruct((n, h_out, w_out, fpad), x_nhwc.dtype),
        grid_spec=pltpu.PrefetchScalarGridSpec(
            num_scalar_prefetch=0,
            grid=(n, h_out // th),
            in_specs=[
                pl.BlockSpec(memory_space=pl.ANY),                    # x in HBM
                pl.BlockSpec((k * k, cpad, fpad), lambda b, t: (0, 0, 0)),
                pl.BlockSpec((1, fpad), lambda b, t: (0, 0)),
            ],
            out_specs=pl.BlockSpec((1, th, w_out, fpad),
                                   lambda b, t: (b, t, 0, 0)),
            scratch_shapes=[
                pltpu.VMEM((rows, w_pad, cpad), x_nhwc.dtype),
                pltpu.SemaphoreType.DMA((1,)),
            ],
        ),
        compiler_params=pltpu.CompilerParams(
            dimension_semantics=("parallel", "parallel"),
            vmem_limit_bytes=48 * 1024 * 1024,   # stays under v7x's 64 MiB
        ),
    )(xp, wk, bp)


def conv_block_forward(x_nchw, w1, b1, pad1, w2, b2, pad2, slope=0.2):
    """ConvBlock.forward (downsample=False, fused=False path). NCHW in/out."""
    # TODO(synk): the optional downsample branches of ConvBlock (Blur +
    # FusedDownsample / EqualConv2d + AvgPool2d) are not implemented here;
    # only the default (downsample=False) forward is covered.
    # TODO(synk): fuse conv1+conv2 into a single pallas_call (keep the
    # intermediate row band in VMEM) to skip one HBM round trip of the
    # activation; needs halo recompute across row tiles.
    n, c_in, h, w = x_nchw.shape
    cpad = _round_up(c_in, LANE)
    x = jnp.transpose(x_nchw, (0, 2, 3, 1))                     # NCHW -> NHWC
    x = jnp.pad(x, ((0, 0), (0, 0), (0, 0), (0, cpad - c_in)))  # lane-dense C
    y = _equal_conv2d_lrelu(x, w1, b1, pad1, slope)
    y = _equal_conv2d_lrelu(y, w2, b2, pad2, slope)
    f2 = w2.shape[0]
    return jnp.transpose(y[..., :f2], (0, 3, 1, 2))             # back to NCHW


def _reference(x_nchw, w1, b1, pad1, w2, b2, pad2, slope=0.2):
    """Independent XLA reference for ConvBlock's default forward."""
    def eq_conv_lrelu(x, wgt, b, pad):
        f, c, k, _ = wgt.shape
        mult = sqrt(2.0 / (c * k * k))
        out = jax.lax.conv_general_dilated(
            x, wgt * mult, window_strides=(1, 1),
            padding=[(pad, pad), (pad, pad)],
            dimension_numbers=("NCHW", "OIHW", "NCHW"))
        out = out + b.reshape(1, -1, 1, 1)
        return jnp.where(out >= 0, out, slope * out)
    y = eq_conv_lrelu(x_nchw, w1, b1, pad1)
    return eq_conv_lrelu(y, w2, b2, pad2)


if __name__ == "__main__":
    key = jax.random.PRNGKey(0)
    kx, k1, k2, kb1, kb2 = jax.random.split(key, 5)

    N, C_IN, C_OUT, H, W = 2, 4, 4, 16, 16
    KSIZE, PAD = 3, 1

    x = jax.random.normal(kx, (N, C_IN, H, W), dtype=jnp.float32)
    w1 = jax.random.normal(k1, (C_OUT, C_IN, KSIZE, KSIZE), dtype=jnp.float32)
    w2 = jax.random.normal(k2, (C_OUT, C_OUT, KSIZE, KSIZE), dtype=jnp.float32)
    b1 = 0.1 * jax.random.normal(kb1, (C_OUT,), dtype=jnp.float32)
    b2 = 0.1 * jax.random.normal(kb2, (C_OUT,), dtype=jnp.float32)

    out = conv_block_forward(x, w1, b1, PAD, w2, b2, PAD)
    out = jax.block_until_ready(out)

    ref = _reference(x, w1, b1, PAD, w2, b2, PAD)
    assert out.shape == (N, C_OUT, H, W), out.shape
    assert jnp.allclose(out, ref, atol=1e-4, rtol=1e-4), \
        float(jnp.max(jnp.abs(out - ref)))

    print("KERNEL_OK")
</pallas_src>

<mosaic_0001>
module attributes {stable_mosaic.version = 11 : i64} {
  func.func @_conv_lrelu_kernel(%arg0: i32, %arg1: i32, %arg2: memref<2x18x18x128xf32, #tpu.memory_space<any>>, %arg3: memref<9x128x128xf32, #tpu.memory_space<vmem>>, %arg4: memref<1x128xf32, #tpu.memory_space<vmem>>, %arg5: memref<1x8x16x128xf32, #tpu.memory_space<vmem>>, %arg6: memref<10x18x128xf32, #tpu.memory_space<vmem>>, %arg7: memref<1x!tpu.dma_semaphore, #tpu.memory_space<semaphore_mem>>) attributes {dimension_semantics = [#tpu.dimension_semantics<parallel>, #tpu.dimension_semantics<parallel>], iteration_bounds = array<i64: 2, 2>, scalar_prefetch = 0 : i64, scratch_operands = 2 : i64, tpu.core_type = #tpu.core_type<tc>, window_params = [{}, {pipeline_mode = #tpu.pipeline_mode<synchronous>, transform_indices = @transform_1, window_bounds = array<i64: 9, 128, 128>}, {pipeline_mode = #tpu.pipeline_mode<synchronous>, transform_indices = @transform_2, window_bounds = array<i64: 1, 128>}, {transform_indices = @transform_3, window_bounds = array<i64: 1, 8, 16, 128>}]} {
    %c8_i32 = arith.constant 8 : i32
    %0 = arith.muli %arg1, %c8_i32 : i32
    %1 = tpu.assume_multiple %0, 8 : i32
    %c0_i32 = arith.constant 0 : i32
    %c0_i32_0 = arith.constant 0 : i32
    %c0_i32_1 = arith.constant 0 : i32
    %2 = tpu.memref_slice %arg2[%arg0, %1, %c0_i32_0, %c0_i32_1] : memref<2x18x18x128xf32, #tpu.memory_space<any>> -> memref<1x10x18x128xf32, #tpu.memory_space<any>>
    %3 = tpu.memref_squeeze %2 : memref<1x10x18x128xf32, #tpu.memory_space<any>> -> memref<10x18x128xf32, #tpu.memory_space<any>>
    %4 = tpu.memref_slice %arg7[%c0_i32] : memref<1x!tpu.dma_semaphore, #tpu.memory_space<semaphore_mem>> -> memref<1x!tpu.dma_semaphore, #tpu.memory_space<semaphore_mem>>
    %5 = tpu.memref_squeeze %4 : memref<1x!tpu.dma_semaphore, #tpu.memory_space<semaphore_mem>> -> memref<!tpu.dma_semaphore, #tpu.memory_space<semaphore_mem>>
    tpu.enqueue_dma source(%3 : memref<10x18x128xf32, #tpu.memory_space<any>>) target(%arg6 : memref<10x18x128xf32, #tpu.memory_space<vmem>>) target_semaphore(%5 : memref<!tpu.dma_semaphore, #tpu.memory_space<semaphore_mem>>)
    %c0_i32_2 = arith.constant 0 : i32
    %c0_i32_3 = arith.constant 0 : i32
    %c0_i32_4 = arith.constant 0 : i32
    %6 = tpu.memref_slice %arg2[%arg0, %1, %c0_i32_3, %c0_i32_4] : memref<2x18x18x128xf32, #tpu.memory_space<any>> -> memref<1x10x18x128xf32, #tpu.memory_space<any>>
    %7 = tpu.memref_squeeze %6 : memref<1x10x18x128xf32, #tpu.memory_space<any>> -> memref<10x18x128xf32, #tpu.memory_space<any>>
    %8 = tpu.memref_slice %arg7[%c0_i32_2] : memref<1x!tpu.dma_semaphore, #tpu.memory_space<semaphore_mem>> -> memref<1x!tpu.dma_semaphore, #tpu.memory_space<semaphore_mem>>
    %9 = tpu.memref_squeeze %8 : memref<1x!tpu.dma_semaphore, #tpu.memory_space<semaphore_mem>> -> memref<!tpu.dma_semaphore, #tpu.memory_space<semaphore_mem>>
    tpu.wait_dma2 semaphore(%9 : memref<!tpu.dma_semaphore, #tpu.memory_space<semaphore_mem>>) src(%7 : memref<10x18x128xf32, #tpu.memory_space<any>>) dst(%arg6 : memref<10x18x128xf32, #tpu.memory_space<vmem>>)
    %cst = arith.constant 0.000000e+00 : f32
    %10 = vector.broadcast %cst : f32 to vector<128x128xf32>
    %c0 = arith.constant 0 : index
    %c0_5 = arith.constant 0 : index
    %c0_6 = arith.constant 0 : index
    %11 = vector.load %arg6[%c0, %c0_5, %c0_6] : memref<10x18x128xf32, #tpu.memory_space<vmem>>, vector<8x16x128xf32>
    %12 = vector.shape_cast %11 : vector<8x16x128xf32> to vector<128x128xf32>
    %c0_7 = arith.constant 0 : index
    %c0_8 = arith.constant 0 : index
    %c0_9 = arith.constant 0 : index
    %13 = vector.load %arg3[%c0_7, %c0_8, %c0_9] : memref<9x128x128xf32, #tpu.memory_space<vmem>>, vector<1x128x128xf32>
    %14 = vector.shape_cast %13 : vector<1x128x128xf32> to vector<128x128xf32>
    %cst_10 = arith.constant dense<0.000000e+00> : vector<128x128xf32>
    %15 = tpu.matmul %12, %14, %cst_10 {dimension_numbers = #tpu.dot_dimension_numbers<[1], [0], [0], [1], [0, 0, 1, 1], [], []>} : vector<128x128xf32>, vector<128x128xf32>, vector<128x128xf32> -> vector<128x128xf32>
    %16 = arith.addf %10, %15 : vector<128x128xf32>
    %c0_11 = arith.constant 0 : index
    %c1 = arith.constant 1 : index
    %c0_12 = arith.constant 0 : index
    %17 = vector.load %arg6[%c0_11, %c1, %c0_12] : memref<10x18x128xf32, #tpu.memory_space<vmem>>, vector<8x16x128xf32>
    %18 = vector.shape_cast %17 : vector<8x16x128xf32> to vector<128x128xf32>
    %c1_13 = arith.constant 1 : index
    %c0_14 = arith.constant 0 : index
    %c0_15 = arith.constant 0 : index
    %19 = vector.load %arg3[%c1_13, %c0_14, %c0_15] : memref<9x128x128xf32, #tpu.memory_space<vmem>>, vector<1x128x128xf32>
    %20 = vector.shape_cast %19 : vector<1x128x128xf32> to vector<128x128xf32>
    %cst_16 = arith.constant dense<0.000000e+00> : vector<128x128xf32>
    %21 = tpu.matmul %18, %20, %cst_16 {dimension_numbers = #tpu.dot_dimension_numbers<[1], [0], [0], [1], [0, 0, 1, 1], [], []>} : vector<128x128xf32>, vector<128x128xf32>, vector<128x128xf32> -> vector<128x128xf32>
    %22 = arith.addf %16, %21 : vector<128x128xf32>
    %c0_17 = arith.constant 0 : index
    %c2 = arith.constant 2 : index
    %c0_18 = arith.constant 0 : index
    %23 = vector.load %arg6[%c0_17, %c2, %c0_18] : memref<10x18x128xf32, #tpu.memory_space<vmem>>, vector<8x16x128xf32>
    %24 = vector.shape_cast %23 : vector<8x16x128xf32> to vector<128x128xf32>
    %c2_19 = arith.constant 2 : index
    %c0_20 = arith.constant 0 : index
    %c0_21 = arith.constant 0 : index
    %25 = vector.load %arg3[%c2_19, %c0_20, %c0_21] : memref<9x128x128xf32, #tpu.memory_space<vmem>>, vector<1x128x128xf32>
    %26 = vector.shape_cast %25 : vector<1x128x128xf32> to vector<128x128xf32>
    %cst_22 = arith.constant dense<0.000000e+00> : vector<128x128xf32>
    %27 = tpu.matmul %24, %26, %cst_22 {dimension_numbers = #tpu.dot_dimension_numbers<[1], [0], [0], [1], [0, 0, 1, 1], [], []>} : vector<128x128xf32>, vector<128x128xf32>, vector<128x128xf32> -> vector<128x128xf32>
    %28 = arith.addf %22, %27 : vector<128x128xf32>
    %c1_23 = arith.constant 1 : index
    %c0_24 = arith.constant 0 : index
    %c0_25 = arith.constant 0 : index
    %29 = vector.load %arg6[%c1_23, %c0_24, %c0_25] : memref<10x18x128xf32, #tpu.memory_space<vmem>>, vector<8x16x128xf32>
    %30 = vector.shape_cast %29 : vector<8x16x128xf32> to vector<128x128xf32>
    %c3 = arith.constant 3 : index
    %c0_26 = arith.constant 0 : index
    %c0_27 = arith.constant 0 : index
    %31 = vector.load %arg3[%c3, %c0_26, %c0_27] : memref<9x128x128xf32, #tpu.memory_space<vmem>>, vector<1x128x128xf32>
    %32 = vector.shape_cast %31 : vector<1x128x128xf32> to vector<128x128xf32>
    %cst_28 = arith.constant dense<0.000000e+00> : vector<128x128xf32>
    %33 = tpu.matmul %30, %32, %cst_28 {dimension_numbers = #tpu.dot_dimension_numbers<[1], [0], [0], [1], [0, 0, 1, 1], [], []>} : vector<128x128xf32>, vector<128x128xf32>, vector<128x128xf32> -> vector<128x128xf32>
    %34 = arith.addf %28, %33 : vector<128x128xf32>
    %c1_29 = arith.constant 1 : index
    %c1_30 = arith.constant 1 : index
    %c0_31 = arith.constant 0 : index
    %35 = vector.load %arg6[%c1_29, %c1_30, %c0_31] : memref<10x18x128xf32, #tpu.memory_space<vmem>>, vector<8x16x128xf32>
    %36 = vector.shape_cast %35 : vector<8x16x128xf32> to vector<128x128xf32>
    %c4 = arith.constant 4 : index
    %c0_32 = arith.constant 0 : index
    %c0_33 = arith.constant 0 : index
    %37 = vector.load %arg3[%c4, %c0_32, %c0_33] : memref<9x128x128xf32, #tpu.memory_space<vmem>>, vector<1x128x128xf32>
    %38 = vector.shape_cast %37 : vector<1x128x128xf32> to vector<128x128xf32>
    %cst_34 = arith.constant dense<0.000000e+00> : vector<128x128xf32>
    %39 = tpu.matmul %36, %38, %cst_34 {dimension_numbers = #tpu.dot_dimension_numbers<[1], [0], [0], [1], [0, 0, 1, 1], [], []>} : vector<128x128xf32>, vector<128x128xf32>, vector<128x128xf32> -> vector<128x128xf32>
    %40 = arith.addf %34, %39 : vector<128x128xf32>
    %c1_35 = arith.constant 1 : index
    %c2_36 = arith.constant 2 : index
    %c0_37 = arith.constant 0 : index
    %41 = vector.load %arg6[%c1_35, %c2_36, %c0_37] : memref<10x18x128xf32, #tpu.memory_space<vmem>>, vector<8x16x128xf32>
    %42 = vector.shape_cast %41 : vector<8x16x128xf32> to vector<128x128xf32>
    %c5 = arith.constant 5 : index
    %c0_38 = arith.constant 0 : index
    %c0_39 = arith.constant 0 : index
    %43 = vector.load %arg3[%c5, %c0_38, %c0_39] : memref<9x128x128xf32, #tpu.memory_space<vmem>>, vector<1x128x128xf32>
    %44 = vector.shape_cast %43 : vector<1x128x128xf32> to vector<128x128xf32>
    %cst_40 = arith.constant dense<0.000000e+00> : vector<128x128xf32>
    %45 = tpu.matmul %42, %44, %cst_40 {dimension_numbers = #tpu.dot_dimension_numbers<[1], [0], [0], [1], [0, 0, 1, 1], [], []>} : vector<128x128xf32>, vector<128x128xf32>, vector<128x128xf32> -> vector<128x128xf32>
    %46 = arith.addf %40, %45 : vector<128x128xf32>
    %c2_41 = arith.constant 2 : index
    %c0_42 = arith.constant 0 : index
    %c0_43 = arith.constant 0 : index
    %47 = vector.load %arg6[%c2_41, %c0_42, %c0_43] : memref<10x18x128xf32, #tpu.memory_space<vmem>>, vector<8x16x128xf32>
    %48 = vector.shape_cast %47 : vector<8x16x128xf32> to vector<128x128xf32>
    %c6 = arith.constant 6 : index
    %c0_44 = arith.constant 0 : index
    %c0_45 = arith.constant 0 : index
    %49 = vector.load %arg3[%c6, %c0_44, %c0_45] : memref<9x128x128xf32, #tpu.memory_space<vmem>>, vector<1x128x128xf32>
    %50 = vector.shape_cast %49 : vector<1x128x128xf32> to vector<128x128xf32>
    %cst_46 = arith.constant dense<0.000000e+00> : vector<128x128xf32>
    %51 = tpu.matmul %48, %50, %cst_46 {dimension_numbers = #tpu.dot_dimension_numbers<[1], [0], [0], [1], [0, 0, 1, 1], [], []>} : vector<128x128xf32>, vector<128x128xf32>, vector<128x128xf32> -> vector<128x128xf32>
    %52 = arith.addf %46, %51 : vector<128x128xf32>
    %c2_47 = arith.constant 2 : index
    %c1_48 = arith.constant 1 : index
    %c0_49 = arith.constant 0 : index
    %53 = vector.load %arg6[%c2_47, %c1_48, %c0_49] : memref<10x18x128xf32, #tpu.memory_space<vmem>>, vector<8x16x128xf32>
    %54 = vector.shape_cast %53 : vector<8x16x128xf32> to vector<128x128xf32>
    %c7 = arith.constant 7 : index
    %c0_50 = arith.constant 0 : index
    %c0_51 = arith.constant 0 : index
    %55 = vector.load %arg3[%c7, %c0_50, %c0_51] : memref<9x128x128xf32, #tpu.memory_space<vmem>>, vector<1x128x128xf32>
    %56 = vector.shape_cast %55 : vector<1x128x128xf32> to vector<128x128xf32>
    %cst_52 = arith.constant dense<0.000000e+00> : vector<128x128xf32>
    %57 = tpu.matmul %54, %56, %cst_52 {dimension_numbers = #tpu.dot_dimension_numbers<[1], [0], [0], [1], [0, 0, 1, 1], [], []>} : vector<128x128xf32>, vector<128x128xf32>, vector<128x128xf32> -> vector<128x128xf32>
    %58 = arith.addf %52, %57 : vector<128x128xf32>
    %c2_53 = arith.constant 2 : index
    %c2_54 = arith.constant 2 : index
    %c0_55 = arith.constant 0 : index
    %59 = vector.load %arg6[%c2_53, %c2_54, %c0_55] : memref<10x18x128xf32, #tpu.memory_space<vmem>>, vector<8x16x128xf32>
    %60 = vector.shape_cast %59 : vector<8x16x128xf32> to vector<128x128xf32>
    %c8 = arith.constant 8 : index
    %c0_56 = arith.constant 0 : index
    %c0_57 = arith.constant 0 : index
    %61 = vector.load %arg3[%c8, %c0_56, %c0_57] : memref<9x128x128xf32, #tpu.memory_space<vmem>>, vector<1x128x128xf32>
    %62 = vector.shape_cast %61 : vector<1x128x128xf32> to vector<128x128xf32>
    %cst_58 = arith.constant dense<0.000000e+00> : vector<128x128xf32>
    %63 = tpu.matmul %60, %62, %cst_58 {dimension_numbers = #tpu.dot_dimension_numbers<[1], [0], [0], [1], [0, 0, 1, 1], [], []>} : vector<128x128xf32>, vector<128x128xf32>, vector<128x128xf32> -> vector<128x128xf32>
    %64 = arith.addf %58, %63 : vector<128x128xf32>
    %c0_59 = arith.constant 0 : index
    %c0_60 = arith.constant 0 : index
    %65 = vector.load %arg4[%c0_59, %c0_60] : memref<1x128xf32, #tpu.memory_space<vmem>>, vector<1x128xf32>
    %66 = vector.broadcast %65 : vector<1x128xf32> to vector<128x128xf32>
    %67 = arith.addf %64, %66 : vector<128x128xf32>
    %cst_61 = arith.constant 0.000000e+00 : f32
    %68 = vector.broadcast %cst_61 : f32 to vector<128x128xf32>
    %69 = arith.cmpf oge, %67, %68 : vector<128x128xf32>
    %cst_62 = arith.constant 2.000000e-01 : f32
    %70 = vector.broadcast %cst_62 : f32 to vector<128x128xf32>
    %71 = arith.mulf %70, %67 : vector<128x128xf32>
    %72 = arith.select %69, %67, %71 : vector<128x128xi1>, vector<128x128xf32>
    %73 = vector.shape_cast %72 : vector<128x128xf32> to vector<8x16x128xf32>
    %c0_63 = arith.constant 0 : index
    %c0_64 = arith.constant 0 : index
    %c0_65 = arith.constant 0 : index
    %c0_66 = arith.constant 0 : index
    %74 = vector.load %arg5[%c0_63, %c0_64, %c0_65, %c0_66] : memref<1x8x16x128xf32, #tpu.memory_space<vmem>>, vector<1x8x16x128xf32>
    %75 = vector.shape_cast %74 : vector<1x8x16x128xf32> to vector<8x16x128xf32>
    %76 = vector.shape_cast %73 : vector<8x16x128xf32> to vector<1x8x16x128xf32>
    tpu.vector_store %arg5[%c0_63, %c0_64, %c0_65, %c0_66], %76 {strides = array<i32>} : memref<1x8x16x128xf32, #tpu.memory_space<vmem>>, vector<1x8x16x128xf32>,
    return
  }
  func.func @transform_1(%arg0: i32, %arg1: i32) -> (i32, i32, i32) {
    %c0_i32 = arith.constant 0 : i32
    %c0_i32_0 = arith.constant 0 : i32
    %c0_i32_1 = arith.constant 0 : i32
    %c0_i32_2 = arith.constant 0 : i32
    return %c0_i32, %c0_i32_0, %c0_i32_1 : i32, i32, i32
  }
  func.func @transform_2(%arg0: i32, %arg1: i32) -> (i32, i32) {
    %c0_i32 = arith.constant 0 : i32
    %c0_i32_0 = arith.constant 0 : i32
    %c0_i32_1 = arith.constant 0 : i32
    return %c0_i32, %c0_i32_0 : i32, i32
  }
  func.func @transform_3(%arg0: i32, %arg1: i32) -> (i32, i32, i32, i32) {
    %c0_i32 = arith.constant 0 : i32
    %c0_i32_0 = arith.constant 0 : i32
    %c0_i32_1 = arith.constant 0 : i32
    return %arg0, %arg1, %c0_i32, %c0_i32_0 : i32, i32, i32, i32
  }
}

</mosaic_0001>

<llo_original>
// kernel: tpu_custom_call.1
$region0: #{tpu_custom_call.1}
  #allocation0 [shape = 'u32[]', space=smem, size = 0x4, offset = 0x4, fixed_abs, tag = 'smem constant byte address 0x4 - core index']
  #allocation1 [shape = 'u32[72,128]{1,0:T(1,128)}', space=vmem, size = 0x9000, scoped, tag = 'internal scratch']
  #allocation2 [shape = 'f32[10,18,128]{2,1,0:T(8,128)}', space=vmem, size = 0x1e000, scoped, tag = 'scratch operand']
  #allocation3 [shape = 's32[1]{0}', space=sflag, size = 0x4, scoped, tag = 'scratch operand']
  #allocation6 [shape = 's32[]', space=sflag, size = 0x4, offset = 0, fixed_abs, tag = 'sflag constant byte address 0x0 - dummy sync flag']
  %s0 = inlined_call_operand.vmem [shape: f32[2,18,18,128], index: 0, kind: input, shape index: {}]
  %s1 = inlined_call_operand.vmem [shape: f32[9,128,128], index: 1, kind: input, shape index: {}]
  %s2 = inlined_call_operand.vmem [shape: f32[1,128], index: 2, kind: input, shape index: {}]
  %s3 = inlined_call_operand.hbm [shape: f32[2,16,16,128], index: 3, kind: output, shape index: {}]
  %s4 = sld [smem:[#allocation0]]
  $region63: #{tpu_custom_call.1} parent=0
    _
  %s6 = ssub.s32 1, %s4
  %s7 = scalar_select 0, %s6, %s4
  $region1: #{tpu_custom_call.1} parent=0
    #allocation4 [shape = 'u8[131072]{0}', space=vmem, size = 0x20000, scoped, tag = 'output window, operand 0']
    #allocation5 [shape = 's32[2]{0}', space=sflag, size = 0x8, scoped, tag = 'scoped memory for tpu_custom_call.1']
    %8 = vsyncpa [#allocation5], 0
    %s9 = scalar_lea.sflag [#allocation5], 1
    %10 = vsyncpa %s9, 0
    loop: start=0, step=1, limit=6
    $region2: #{tpu_custom_call.1} parent=1 // loop_pre_header
      _
    $region3: #{tpu_custom_call.1} parent=1 // loop_header
      %s12 = sphi 0, %s16
      %p13 = scmp.ge.s32.totalorder %s12, 6
      %s19 = sphi 0, %s31
      %s20 = sphi 0, %s27
      %s21 = sphi 0, %s19
      %s22 = sphi 0, %s20
      %s23 = sphi 0, %s21
      %s24 = sphi 0, %s22
      %s32 = sphi 0, %s32
      %s34 = sphi 0, %s32
      %s35 = sphi 0, %s34
      %s49 = sphi 0, %s35
      %s53 = sphi 0, %s53
      %s55 = sphi 0, %s53
      %s56 = sphi 0, %s55
      %s70 = sphi 0, %s56
      %s78 = sphi 0, %s80
      %s81 = sphi 0, %s78
      %s82 = sphi 0, %s81
      %s98 = sphi 0, %s82
    $region4: #{tpu_custom_call.1} parent=1 // loop_header_branch
      %15 = sbr.rel (%p13) target = $region8
    $region5: #{tpu_custom_call.1} parent=1 // loop_body
      %s17 = ssub.s32 %s12, 1
      %s18 = ssub.s32 %s12, 2
      %s25 = sadd.s32 1, %s20
      %p26 = scmp.ge.s32.totalorder %s25, 2
      %s27 = scalar_select %p26, 0, %s25
      %s28 = sadd.s32 1, %s19
      %s29 = scalar_select %p26, %s28, %s19
      %p30 = scmp.ge.s32.totalorder %s29, 2
      %s31 = scalar_select %p30, 0, %s29
      %s33 = sadd.s32 %s32, 1
      %p36 = scmp.eq.s32.totalorder %s12, 3
      %p37 = scmp.ne.s32.totalorder %s32, %s34
      %p38 = scmp.eq.s32.totalorder %s12, 0
      %p39 = por %p37, %p38
      %p40 = scmp.ne.s32.totalorder %s32, %s34
      %p41 = scmp.eq.s32.totalorder %s17, 3
      %p42 = por %p40, %p41
      %p43 = scmp.ne.s32.totalorder %s34, %s35
      %p44 = scmp.eq.s32.totalorder %s17, 0
      %p45 = por %p43, %p44
      %p46 = scmp.ne.s32.totalorder %s34, %s35
      %p47 = scmp.eq.s32.totalorder %s18, 3
      %p48 = por %p46, %p47
      %p50 = scmp.ne.s32.totalorder %s35, %s49
      %p51 = scmp.eq.s32.totalorder %s18, 0
      %p52 = por %p50, %p51
      %s54 = sadd.s32 %s53, 1
      %p57 = scmp.eq.s32.totalorder %s12, 3
      %p58 = scmp.ne.s32.totalorder %s53, %s55
      %p59 = scmp.eq.s32.totalorder %s12, 0
      %p60 = por %p58, %p59
      %p61 = scmp.ne.s32.totalorder %s53, %s55
      %p62 = scmp.eq.s32.totalorder %s17, 3
      %p63 = por %p61, %p62
      %p64 = scmp.ne.s32.totalorder %s55, %s56
      %p65 = scmp.eq.s32.totalorder %s17, 0
      %p66 = por %p64, %p65
      %p67 = scmp.ne.s32.totalorder %s55, %s56
      %p68 = scmp.eq.s32.totalorder %s18, 3
      %p69 = por %p67, %p68
      %p71 = scmp.ne.s32.totalorder %s56, %s70
      %p72 = scmp.eq.s32.totalorder %s18, 0
      %p73 = por %p71, %p72
      %s74 = ssub.s32 %s19, %s31
      %s75 = ssub.s32 %s20, %s27
      %s76 = sor.u32 %s74, %s75
      %p77 = scmp.eq.s32.totalorder %s76, 0
      %s79 = sadd.s32 %s78, 1
      %s80 = scalar_select %p77, %s78, %s79
      %p83 = pneg %p77
      %p84 = scmp.eq.s32.totalorder %s12, 3
      %p85 = por %p83, %p84
      %p86 = scmp.ne.s32.totalorder %s78, %s81
      %p87 = scmp.eq.s32.totalorder %s12, 0
      %p88 = por %p86, %p87
      %p89 = scmp.ne.s32.totalorder %s78, %s81
      %p90 = scmp.eq.s32.totalorder %s17, 3
      %p91 = por %p89, %p90
      %p92 = scmp.ne.s32.totalorder %s81, %s82
      %p93 = scmp.eq.s32.totalorder %s17, 0
      %p94 = por %p92, %p93
      %p95 = scmp.ne.s32.totalorder %s81, %s82
      %p96 = scmp.eq.s32.totalorder %s18, 3
      %p97 = por %p95, %p96
      %p99 = scmp.ne.s32.totalorder %s82, %s98
      %p100 = scmp.eq.s32.totalorder %s18, 0
      %p101 = por %p99, %p100
      %p102 = scmp.le.s32.totalorder 1, %s12
      %p103 = scmp.lt.s32.totalorder %s12, 5
      %p104 = pnand %p102, %p103
      %p105 = pneg %p104
      // Predicated region
      $region9: #{tpu_custom_call.1} parent=5 // pred_check
        _
      $region10: #{tpu_custom_call.1} parent=5 // pred_check_branch
        %107 = sbr.rel (%p104) target = $region12
      $region11: #{tpu_custom_call.1} parent=5 // pred_region
        %s108 = ssub.s32 %s12, 1
        // Predicated region
        $region13: #{tpu_custom_call.1} parent=11 // pred_check
          %p109 = pneg %p45
        $region14: #{tpu_custom_call.1} parent=11 // pred_check_branch
          %111 = sbr.rel (%p109) target = $region16
        $region15: #{tpu_custom_call.1} parent=11 // pred_region
          _
        $region16: #{tpu_custom_call.1} parent=11 // pred_fallthru
          _
        // Predicated region
        $region17: #{tpu_custom_call.1} parent=11 // pred_check
          %p112 = pneg %p66
        $region18: #{tpu_custom_call.1} parent=11 // pred_check_branch
          %114 = sbr.rel (%p112) target = $region20
        $region19: #{tpu_custom_call.1} parent=11 // pred_region
          _
        $region20: #{tpu_custom_call.1} parent=11 // pred_fallthru
          _
      $region12: #{tpu_custom_call.1} parent=5 // pred_fallthru
        _
      %p115 = scmp.lt.s32.totalorder %s12, 4
      // Predicated region
      $region21: #{tpu_custom_call.1} parent=5 // pred_check
        %p116 = pneg %p115
      $region22: #{tpu_custom_call.1} parent=5 // pred_check_branch
        %118 = sbr.rel (%p116) target = $region24
      $region23: #{tpu_custom_call.1} parent=5 // pred_region
        _
      $region24: #{tpu_custom_call.1} parent=5 // pred_fallthru
        _
      %p119 = scmp.le.s32.totalorder 1, %s12
      %p120 = scmp.lt.s32.totalorder %s12, 5
      %p121 = pnand %p119, %p120
      %p122 = pneg %p121
      // Predicated region
      $region25: #{tpu_custom_call.1} parent=5 // pred_check
        _
      $region26: #{tpu_custom_call.1} parent=5 // pred_check_branch
        %124 = sbr.rel (%p121) target = $region28
      $region27: #{tpu_custom_call.1} parent=5 // pred_region
        %s125 = ssub.s32 %s12, 1
        %p126 = pneg %p45
        %p127 = pneg %p42
        %p128 = pneg %p66
        %p129 = pneg %p63
        %p130 = pneg %p94
        %p131 = pneg %p91
        %s132 = sand.u32 %s81, 1
        %s133 = scalar_lea.sflag [#allocation5], %s132
        %s134 = sand.u32 %s81, 1
        %s135 = smul.addr %s134, 128
        %s136 = scalar_lea.vmem [#allocation4], %s135
        %s137 = smul.u32 8, %s22
        %s138 = smul.u32 %s22, 8
        %s139 = smul.u32 %s138, 24
        %s140 = smul.u32 %s21, 432
        %s141 = sadd.s32 %s139, %s140
        %s142 = scalar_lea.vmem %s0, %s141
        // Predicated region
        $region29: #{tpu_custom_call.1} parent=27 // pred_check
          _
        $region30: #{tpu_custom_call.1} parent=27 // pred_check_branch
          %144 = sbr.rel (0) target = $region32
        $region31: #{tpu_custom_call.1} parent=27 // pred_region
          %s145 = scalar_lea.vmem %s142, 16
          %s146 = scalar_lea.vmem [#allocation2], 16
          loop: start=0, step=1, limit=1
          $region33: #{tpu_custom_call.1} parent=31 // loop_pre_header
            _
          $region34: #{tpu_custom_call.1} parent=31 // loop_header
            %s148 = sphi 0, %s152
            %p149 = scmp.ge.s32.totalorder %s148, 1
            %s153 = sphi %s142, %s142
            %s154 = sphi [#allocation2], [#allocation2]
          $region35: #{tpu_custom_call.1} parent=31 // loop_header_branch
            %151 = sbr.rel (%p149) target = $region39
          $region36: #{tpu_custom_call.1} parent=31 // loop_body
            %v155 = vld [vmem:[%s153] sm:$0xff]
            %156 = vst [vmem:[%s154] sm:$0xff] %v155
            %v157 = vld [vmem:[%s153 + $0x8] sm:$0xff]
            %158 = vst [vmem:[%s154 + $0x8] sm:$0xff] %v157
            %v159 = vld [vmem:[%s153 + $0x18] sm:$0xff]
            %160 = vst [vmem:[%s154 + $0x18] sm:$0xff] %v159
            %v161 = vld [vmem:[%s153 + $0x20] sm:$0xff]
            %162 = vst [vmem:[%s154 + $0x20] sm:$0xff] %v161
            %v163 = vld [vmem:[%s153 + $0x30] sm:$0xff]
            %164 = vst [vmem:[%s154 + $0x30] sm:$0xff] %v163
            %v165 = vld [vmem:[%s153 + $0x38] sm:$0xff]
            %166 = vst [vmem:[%s154 + $0x38] sm:$0xff] %v165
            %v167 = vld [vmem:[%s153 + $0x48] sm:$0xff]
            %168 = vst [vmem:[%s154 + $0x48] sm:$0xff] %v167
            %v169 = vld [vmem:[%s153 + $0x50] sm:$0xff]
            %170 = vst [vmem:[%s154 + $0x50] sm:$0xff] %v169
            %v171 = vld [vmem:[%s153 + $0x60] sm:$0xff]
            %172 = vst [vmem:[%s154 + $0x60] sm:$0xff] %v171
            %v173 = vld [vmem:[%s153 + $0x68] sm:$0xff]
            %174 = vst [vmem:[%s154 + $0x68] sm:$0xff] %v173
            %v175 = vld [vmem:[%s153 + $0x78] sm:$0xff]
            %176 = vst [vmem:[%s154 + $0x78] sm:$0xff] %v175
            %v177 = vld [vmem:[%s153 + $0x80] sm:$0xff]
            %178 = vst [vmem:[%s154 + $0x80] sm:$0xff] %v177
            %v179 = vld [vmem:[%s153 + $0x90] sm:$0xff]
            %180 = vst [vmem:[%s154 + $0x90] sm:$0xff] %v179
            %v181 = vld [vmem:[%s153 + $0x98] sm:$0xff]
            %182 = vst [vmem:[%s154 + $0x98] sm:$0xff] %v181
            %v183 = vld [vmem:[%s153 + $0xa8] sm:$0xff]
            %184 = vst [vmem:[%s154 + $0xa8] sm:$0xff] %v183
            %v185 = vld [vmem:[%s153 + $0xb0] sm:$0xff]
            %186 = vst [vmem:[%s154 + $0xb0] sm:$0xff] %v185
            %v187 = vld [vmem:[%s153 + $0xc0] sm:$0xff]
            %188 = vst [vmem:[%s154 + $0xc0] sm:$0xff] %v187
            %v189 = vld [vmem:[%s153 + $0xc8] sm:$0xff]
            %190 = vst [vmem:[%s154 + $0xc8] sm:$0xff] %v189
            %v191 = vld [vmem:[%s153 + $0xd8] sm:$0xff]
            %192 = vst [vmem:[%s154 + $0xd8] sm:$0xff] %v191
            %v193 = vld [vmem:[%s153 + $0xe0] sm:$0xff]
            %194 = vst [vmem:[%s154 + $0xe0] sm:$0xff] %v193
          $region37: #{tpu_custom_call.1} parent=31 // loop_footer
            %s152 = sadd.s32 1, %s148
          $region38: #{tpu_custom_call.1} parent=31 // loop_footer_branch
            %147 = sbr.rel target = $region34
          $region39: #{tpu_custom_call.1} parent=31 // loop_exit
            _
          %s196 = ssub.s32 4, 1
          loop: start=0, step=1, limit=1
          $region40: #{tpu_custom_call.1} parent=31 // loop_pre_header
            _
          $region41: #{tpu_custom_call.1} parent=31 // loop_header
            %s198 = sphi 0, %s202
            %p199 = scmp.ge.s32.totalorder %s198, 1
            %s203 = sphi %s145, %s145
            %s204 = sphi %s146, %s146
          $region42: #{tpu_custom_call.1} parent=31 // loop_header_branch
            %201 = sbr.rel (%p199) target = $region46
          $region43: #{tpu_custom_call.1} parent=31 // loop_body
            %v205 = vld [vmem:[%s203] sm:%s196]
            %206 = vst [vmem:[%s204] sm:%s196] %v205
            %v207 = vld [vmem:[%s203 + $0x18] sm:%s196]
            %208 = vst [vmem:[%s204 + $0x18] sm:%s196] %v207
            %v209 = vld [vmem:[%s203 + $0x30] sm:%s196]
            %210 = vst [vmem:[%s204 + $0x30] sm:%s196] %v209
            %v211 = vld [vmem:[%s203 + $0x48] sm:%s196]
            %212 = vst [vmem:[%s204 + $0x48] sm:%s196] %v211
            %v213 = vld [vmem:[%s203 + $0x60] sm:%s196]
            %214 = vst [vmem:[%s204 + $0x60] sm:%s196] %v213
            %v215 = vld [vmem:[%s203 + $0x78] sm:%s196]
            %216 = vst [vmem:[%s204 + $0x78] sm:%s196] %v215
            %v217 = vld [vmem:[%s203 + $0x90] sm:%s196]
            %218 = vst [vmem:[%s204 + $0x90] sm:%s196] %v217
            %v219 = vld [vmem:[%s203 + $0xa8] sm:%s196]
            %220 = vst [vmem:[%s204 + $0xa8] sm:%s196] %v219
            %v221 = vld [vmem:[%s203 + $0xc0] sm:%s196]
            %222 = vst [vmem:[%s204 + $0xc0] sm:%s196] %v221
            %v223 = vld [vmem:[%s203 + $0xd8] sm:%s196]
            %224 = vst [vmem:[%s204 + $0xd8] sm:%s196] %v223
          $region44: #{tpu_custom_call.1} parent=31 // loop_footer
            %s202 = sadd.s32 1, %s198
          $region45: #{tpu_custom_call.1} parent=31 // loop_footer_branch
            %197 = sbr.rel target = $region41
          $region46: #{tpu_custom_call.1} parent=31 // loop_exit
            _
        $region32: #{tpu_custom_call.1} parent=27 // pred_fallthru
          _
        // Predicated region
        $region47: #{tpu_custom_call.1} parent=27 // pred_check
          _
        $region48: #{tpu_custom_call.1} parent=27 // pred_check_branch
          %227 = sbr.rel (0) target = $region50
        $region49: #{tpu_custom_call.1} parent=27 // pred_region
          %228 = vsyncadd [#allocation3], 2880
        $region50: #{tpu_custom_call.1} parent=27 // pred_fallthru
          _
        %s229 = smul.u32 10, 18
        %s230 = smul.u32 %s229, 1
        %s231 = sshll.u32 %s230, 4
        %232 = dma.done [#allocation3], %s231
        %v233 = vld [vmem:[#allocation2] sm:$0xff]
        %v234 = vld [vmem:[#allocation2 + $0x8] sm:$0xff]
        %v235 = vld [vmem:[#allocation2 + $0x18] sm:$0xff]
        %v236 = vld [vmem:[#allocation2 + $0x20] sm:$0xff]
        %v237 = vld [vmem:[#allocation2 + $0x30] sm:$0xff]
        %v238 = vld [vmem:[#allocation2 + $0x38] sm:$0xff]
        %v239 = vld [vmem:[#allocation2 + $0x48] sm:$0xff]
        %v240 = vld [vmem:[#allocation2 + $0x50] sm:$0xff]
        %v241 = vld [vmem:[#allocation2 + $0x60] sm:$0xff]
        %v242 = vld [vmem:[#allocation2 + $0x68] sm:$0xff]
        %v243 = vld [vmem:[#allocation2 + $0x78] sm:$0xff]
        %v244 = vld [vmem:[#allocation2 + $0x80] sm:$0xff]
        %v245 = vld [vmem:[#allocation2 + $0x90] sm:$0xff]
        %v246 = vld [vmem:[#allocation2 + $0x98] sm:$0xff]
        %v247 = vld [vmem:[#allocation2 + $0xa8] sm:$0xff]
        %v248 = vld [vmem:[#allocation2 + $0xb0] sm:$0xff]
        %v249 = vld [vmem:[%s1] sm:$0xff]
        %v250 = vld [vmem:[%s1 + $0x8] sm:$0xff]
        %v251 = vld [vmem:[%s1 + $0x10] sm:$0xff]
        %v252 = vld [vmem:[%s1 + $0x18] sm:$0xff]
        %v253 = vld [vmem:[%s1 + $0x20] sm:$0xff]
        %v254 = vld [vmem:[%s1 + $0x28] sm:$0xff]
        %v255 = vld [vmem:[%s1 + $0x30] sm:$0xff]
        %v256 = vld [vmem:[%s1 + $0x38] sm:$0xff]
        %v257 = vld [vmem:[%s1 + $0x40] sm:$0xff]
        %v258 = vld [vmem:[%s1 + $0x48] sm:$0xff]
        %v259 = vld [vmem:[%s1 + $0x50] sm:$0xff]
        %v260 = vld [vmem:[%s1 + $0x58] sm:$0xff]
        %v261 = vld [vmem:[%s1 + $0x60] sm:$0xff]
        %v262 = vld [vmem:[%s1 + $0x68] sm:$0xff]
        %v263 = vld [vmem:[%s1 + $0x70] sm:$0xff]
        %v264 = vld [vmem:[%s1 + $0x78] sm:$0xff]
        %v265 = vld [vmem:[#allocation2 + $0x1] sm:$0xff]
        %v266 = vld [vmem:[#allocation2 + $0x9] sm:$0xff]
        %v267 = vld [vmem:[#allocation2 + $0x19] sm:$0xff]
        %v268 = vld [vmem:[#allocation2 + $0x21] sm:$0xff]
        %v269 = vld [vmem:[#allocation2 + $0x31] sm:$0xff]
        %v270 = vld [vmem:[#allocation2 + $0x39] sm:$0xff]
        %v271 = vld [vmem:[#allocation2 + $0x49] sm:$0xff]
        %v272 = vld [vmem:[#allocation2 + $0x51] sm:$0xff]
        %v273 = vld [vmem:[#allocation2 + $0x61] sm:$0xff]
        %v274 = vld [vmem:[#allocation2 + $0x69] sm:$0xff]
        %v275 = vld [vmem:[#allocation2 + $0x79] sm:$0xff]
        %v276 = vld [vmem:[#allocation2 + $0x81] sm:$0xff]
        %v277 = vld [vmem:[#allocation2 + $0x91] sm:$0xff]
        %v278 = vld [vmem:[#allocation2 + $0x99] sm:$0xff]
        %v279 = vld [vmem:[#allocation2 + $0xa9] sm:$0xff]
        %v280 = vld [vmem:[#allocation2 + $0xb1] sm:$0xff]
        %s281 = scalar_lea.vmem %s1, 128
        %v282 = vld [vmem:[%s281] sm:$0xff]
        %v283 = vld [vmem:[%s281 + $0x8] sm:$0xff]
        %v284 = vld [vmem:[%s281 + $0x10] sm:$0xff]
        %v285 = vld [vmem:[%s281 + $0x18] sm:$0xff]
        %v286 = vld [vmem:[%s281 + $0x20] sm:$0xff]
        %v287 = vld [vmem:[%s281 + $0x28] sm:$0xff]
        %v288 = vld [vmem:[%s281 + $0x30] sm:$0xff]
        %v289 = vld [vmem:[%s281 + $0x38] sm:$0xff]
        %v290 = vld [vmem:[%s281 + $0x40] sm:$0xff]
        %v291 = vld [vmem:[%s281 + $0x48] sm:$0xff]
        %v292 = vld [vmem:[%s281 + $0x50] sm:$0xff]
        %v293 = vld [vmem:[%s281 + $0x58] sm:$0xff]
        %v294 = vld [vmem:[%s281 + $0x60] sm:$0xff]
        %v295 = vld [vmem:[%s281 + $0x68] sm:$0xff]
        %v296 = vld [vmem:[%s281 + $0x70] sm:$0xff]
        %v297 = vld [vmem:[%s281 + $0x78] sm:$0xff]
        %298 = vmatpush.msra.mxu0 %v297
        %299 = vmatpush.msra.mxu0 %v296
        %300 = vmatpush.msra.mxu0 %v295
        %301 = vmatpush.msra.mxu0 %v294
        %302 = vmatpush.msra.mxu0 %v293
        %303 = vmatpush.msra.mxu0 %v292
        %304 = vmatpush.msra.mxu0 %v291
        %305 = vmatpush.msra.mxu0 %v290
        %306 = vmatpush.msra.mxu0 %v289
        %307 = vmatpush.msra.mxu0 %v288
        %308 = vmatpush.msra.mxu0 %v287
        %309 = vmatpush.msra.mxu0 %v286
        %310 = vmatpush.msra.mxu0 %v285
        %311 = vmatpush.msra.mxu0 %v284
        %312 = vmatpush.msra.mxu0 %v283
        %313 = vmatpush.msra.mxu0 %v282
        %314 = vmatmul.f32.gmra.mxu0 %v265
        %v315 = vpop.f32.mrf.mxu0
        %v316 = vadd.f32 0.0, %v315
        %317 = vmatmul.f32.gmra.mxu0 %v266
        %v318 = vpop.f32.mrf.mxu0
        %v319 = vadd.f32 0.0, %v318
        %320 = vmatmul.f32.gmra.mxu0 %v267
        %v321 = vpop.f32.mrf.mxu0
        %v322 = vadd.f32 0.0, %v321
        %323 = vmatmul.f32.gmra.mxu0 %v268
        %v324 = vpop.f32.mrf.mxu0
        %v325 = vadd.f32 0.0, %v324
        %326 = vmatmul.f32.gmra.mxu0 %v269
        %v327 = vpop.f32.mrf.mxu0
        %v328 = vadd.f32 0.0, %v327
        %329 = vmatmul.f32.gmra.mxu0 %v270
        %v330 = vpop.f32.mrf.mxu0
        %v331 = vadd.f32 0.0, %v330
        %332 = vmatmul.f32.gmra.mxu0 %v271
        %v333 = vpop.f32.mrf.mxu0
        %v334 = vadd.f32 0.0, %v333
        %335 = vmatmul.f32.gmra.mxu0 %v272
        %v336 = vpop.f32.mrf.mxu0
        %v337 = vadd.f32 0.0, %v336
        %338 = vmatmul.f32.gmra.mxu0 %v273
        %v339 = vpop.f32.mrf.mxu0
        %v340 = vadd.f32 0.0, %v339
        %341 = vmatmul.f32.gmra.mxu0 %v274
        %v342 = vpop.f32.mrf.mxu0
        %v343 = vadd.f32 0.0, %v342
        %344 = vmatmul.f32.gmra.mxu0 %v275
        %v345 = vpop.f32.mrf.mxu0
        %v346 = vadd.f32 0.0, %v345
        %347 = vmatmul.f32.gmra.mxu0 %v276
        %v348 = vpop.f32.mrf.mxu0
        %v349 = vadd.f32 0.0, %v348
        %350 = vmatmul.f32.gmra.mxu0 %v277
        %v351 = vpop.f32.mrf.mxu0
        %v352 = vadd.f32 0.0, %v351
        %353 = vmatmul.f32.gmra.mxu0 %v278
        %v354 = vpop.f32.mrf.mxu0
        %v355 = vadd.f32 0.0, %v354
        %356 = vmatmul.f32.gmra.mxu0 %v279
        %v357 = vpop.f32.mrf.mxu0
        %v358 = vadd.f32 0.0, %v357
        %359 = vmatmul.f32.gmra.mxu0 %v280
        %v360 = vpop.f32.mrf.mxu0
        %v361 = vadd.f32 0.0, %v360
        %362 = vdwg.mxu0
        %363 = vmatpush.msra.mxu0 %v264
        %364 = vmatpush.msra.mxu0 %v263
        %365 = vmatpush.msra.mxu0 %v262
        %366 = vmatpush.msra.mxu0 %v261
        %367 = vmatpush.msra.mxu0 %v260
        %368 = vmatpush.msra.mxu0 %v259
        %369 = vmatpush.msra.mxu0 %v258
        %370 = vmatpush.msra.mxu0 %v257
        %371 = vmatpush.msra.mxu0 %v256
        %372 = vmatpush.msra.mxu0 %v255
        %373 = vmatpush.msra.mxu0 %v254
        %374 = vmatpush.msra.mxu0 %v253
        %375 = vmatpush.msra.mxu0 %v252
        %376 = vmatpush.msra.mxu0 %v251
        %377 = vmatpush.msra.mxu0 %v250
        %378 = vmatpush.msra.mxu0 %v249
        %379 = vmatmul.f32.gmra.mxu0 %v233
        %v380 = vpop.f32.mrf.mxu0
        %v381 = vadd.f32 %v316, %v380
        %382 = vmatmul.f32.gmra.mxu0 %v234
        %v383 = vpop.f32.mrf.mxu0
        %v384 = vadd.f32 %v319, %v383
        %385 = vmatmul.f32.gmra.mxu0 %v235
        %v386 = vpop.f32.mrf.mxu0
        %v387 = vadd.f32 %v322, %v386
        %388 = vmatmul.f32.gmra.mxu0 %v236
        %v389 = vpop.f32.mrf.mxu0
        %v390 = vadd.f32 %v325, %v389
        %391 = vmatmul.f32.gmra.mxu0 %v237
        %v392 = vpop.f32.mrf.mxu0
        %v393 = vadd.f32 %v328, %v392
        %394 = vmatmul.f32.gmra.mxu0 %v238
        %v395 = vpop.f32.mrf.mxu0
        %v396 = vadd.f32 %v331, %v395
        %397 = vmatmul.f32.gmra.mxu0 %v239
        %v398 = vpop.f32.mrf.mxu0
        %v399 = vadd.f32 %v334, %v398
        %400 = vmatmul.f32.gmra.mxu0 %v240
        %v401 = vpop.f32.mrf.mxu0
        %v402 = vadd.f32 %v337, %v401
        %403 = vmatmul.f32.gmra.mxu0 %v241
        %v404 = vpop.f32.mrf.mxu0
        %v405 = vadd.f32 %v340, %v404
        %406 = vmatmul.f32.gmra.mxu0 %v242
        %v407 = vpop.f32.mrf.mxu0
        %v408 = vadd.f32 %v343, %v407
        %409 = vmatmul.f32.gmra.mxu0 %v243
        %v410 = vpop.f32.mrf.mxu0
        %v411 = vadd.f32 %v346, %v410
        %412 = vmatmul.f32.gmra.mxu0 %v244
        %v413 = vpop.f32.mrf.mxu0
        %v414 = vadd.f32 %v349, %v413
        %415 = vmatmul.f32.gmra.mxu0 %v245
        %v416 = vpop.f32.mrf.mxu0
        %v417 = vadd.f32 %v352, %v416
        %418 = vmatmul.f32.gmra.mxu0 %v246
        %v419 = vpop.f32.mrf.mxu0
        %v420 = vadd.f32 %v355, %v419
        %421 = vmatmul.f32.gmra.mxu0 %v247
        %v422 = vpop.f32.mrf.mxu0
        %v423 = vadd.f32 %v358, %v422
        %424 = vmatmul.f32.gmra.mxu0 %v248
        %v425 = vpop.f32.mrf.mxu0
        %v426 = vadd.f32 %v361, %v425
        %427 = vdwg.mxu0
        %v428 = vld [vmem:[#allocation2 + $0x2] sm:$0xff]
        %v429 = vld [vmem:[#allocation2 + $0xa] sm:$0xff]
        %v430 = vld [vmem:[#allocation2 + $0x1a] sm:$0xff]
        %v431 = vld [vmem:[#allocation2 + $0x22] sm:$0xff]
        %v432 = vld [vmem:[#allocation2 + $0x32] sm:$0xff]
        %v433 = vld [vmem:[#allocation2 + $0x3a] sm:$0xff]
        %v434 = vld [vmem:[#allocation2 + $0x4a] sm:$0xff]
        %v435 = vld [vmem:[#allocation2 + $0x52] sm:$0xff]
        %v436 = vld [vmem:[#allocation2 + $0x62] sm:$0xff]
        %v437 = vld [vmem:[#allocation2 + $0x6a] sm:$0xff]
        %v438 = vld [vmem:[#allocation2 + $0x7a] sm:$0xff]
        %v439 = vld [vmem:[#allocation2 + $0x82] sm:$0xff]
        %v440 = vld [vmem:[#allocation2 + $0x92] sm:$0xff]
        %v441 = vld [vmem:[#allocation2 + $0x9a] sm:$0xff]
        %v442 = vld [vmem:[#allocation2 + $0xaa] sm:$0xff]
        %v443 = vld [vmem:[#allocation2 + $0xb2] sm:$0xff]
        %s444 = scalar_lea.vmem %s1, 256
        %v445 = vld [vmem:[%s444] sm:$0xff]
        %v446 = vld [vmem:[%s444 + $0x8] sm:$0xff]
        %v447 = vld [vmem:[%s444 + $0x10] sm:$0xff]
        %v448 = vld [vmem:[%s444 + $0x18] sm:$0xff]
        %v449 = vld [vmem:[%s444 + $0x20] sm:$0xff]
        %v450 = vld [vmem:[%s444 + $0x28] sm:$0xff]
        %v451 = vld [vmem:[%s444 + $0x30] sm:$0xff]
        %v452 = vld [vmem:[%s444 + $0x38] sm:$0xff]
        %v453 = vld [vmem:[%s444 + $0x40] sm:$0xff]
        %v454 = vld [vmem:[%s444 + $0x48] sm:$0xff]
        %v455 = vld [vmem:[%s444 + $0x50] sm:$0xff]
        %v456 = vld [vmem:[%s444 + $0x58] sm:$0xff]
        %v457 = vld [vmem:[%s444 + $0x60] sm:$0xff]
        %v458 = vld [vmem:[%s444 + $0x68] sm:$0xff]
        %v459 = vld [vmem:[%s444 + $0x70] sm:$0xff]
        %v460 = vld [vmem:[%s444 + $0x78] sm:$0xff]
        %461 = vmatpush.msra.mxu0 %v460
        %462 = vmatpush.msra.mxu0 %v459
        %463 = vmatpush.msra.mxu0 %v458
        %464 = vmatpush.msra.mxu0 %v457
        %465 = vmatpush.msra.mxu0 %v456
        %466 = vmatpush.msra.mxu0 %v455
        %467 = vmatpush.msra.mxu0 %v454
        %468 = vmatpush.msra.mxu0 %v453
        %469 = vmatpush.msra.mxu0 %v452
        %470 = vmatpush.msra.mxu0 %v451
        %471 = vmatpush.msra.mxu0 %v450
        %472 = vmatpush.msra.mxu0 %v449
        %473 = vmatpush.msra.mxu0 %v448
        %474 = vmatpush.msra.mxu0 %v447
        %475 = vmatpush.msra.mxu0 %v446
        %476 = vmatpush.msra.mxu0 %v445
        %477 = vmatmul.f32.gmra.mxu0 %v428
        %v478 = vpop.f32.mrf.mxu0
        %v479 = vadd.f32 0.0, %v478
        %480 = vmatmul.f32.gmra.mxu0 %v429
        %v481 = vpop.f32.mrf.mxu0
        %v482 = vadd.f32 0.0, %v481
        %483 = vmatmul.f32.gmra.mxu0 %v430
        %v484 = vpop.f32.mrf.mxu0
        %v485 = vadd.f32 0.0, %v484
        %486 = vmatmul.f32.gmra.mxu0 %v431
        %v487 = vpop.f32.mrf.mxu0
        %v488 = vadd.f32 0.0, %v487
        %489 = vmatmul.f32.gmra.mxu0 %v432
        %v490 = vpop.f32.mrf.mxu0
        %v491 = vadd.f32 0.0, %v490
        %492 = vmatmul.f32.gmra.mxu0 %v433
        %v493 = vpop.f32.mrf.mxu0
        %v494 = vadd.f32 0.0, %v493
        %495 = vmatmul.f32.gmra.mxu0 %v434
        %v496 = vpop.f32.mrf.mxu0
        %v497 = vadd.f32 0.0, %v496
        %498 = vmatmul.f32.gmra.mxu0 %v435
        %v499 = vpop.f32.mrf.mxu0
        %v500 = vadd.f32 0.0, %v499
        %501 = vmatmul.f32.gmra.mxu0 %v436
        %v502 = vpop.f32.mrf.mxu0
        %v503 = vadd.f32 0.0, %v502
        %504 = vmatmul.f32.gmra.mxu0 %v437
        %v505 = vpop.f32.mrf.mxu0
        %v506 = vadd.f32 0.0, %v505
        %507 = vmatmul.f32.gmra.mxu0 %v438
        %v508 = vpop.f32.mrf.mxu0
        %v509 = vadd.f32 0.0, %v508
        %510 = vmatmul.f32.gmra.mxu0 %v439
        %v511 = vpop.f32.mrf.mxu0
        %v512 = vadd.f32 0.0, %v511
        %513 = vmatmul.f32.gmra.mxu0 %v440
        %v514 = vpop.f32.mrf.mxu0
        %v515 = vadd.f32 0.0, %v514
        %516 = vmatmul.f32.gmra.mxu0 %v441
        %v517 = vpop.f32.mrf.mxu0
        %v518 = vadd.f32 0.0, %v517
        %519 = vmatmul.f32.gmra.mxu0 %v442
        %v520 = vpop.f32.mrf.mxu0
        %v521 = vadd.f32 0.0, %v520
        %522 = vmatmul.f32.gmra.mxu0 %v443
        %v523 = vpop.f32.mrf.mxu0
        %v524 = vadd.f32 0.0, %v523
        %525 = vdwg.mxu0
        %v526 = vadd.f32 %v381, %v479
        %v527 = vadd.f32 %v384, %v482
        %v528 = vadd.f32 %v387, %v485
        %v529 = vadd.f32 %v390, %v488
        %v530 = vadd.f32 %v393, %v491
        %v531 = vadd.f32 %v396, %v494
        %v532 = vadd.f32 %v399, %v497
        %v533 = vadd.f32 %v402, %v500
        %v534 = vadd.f32 %v405, %v503
        %v535 = vadd.f32 %v408, %v506
        %v536 = vadd.f32 %v411, %v509
        %v537 = vadd.f32 %v414, %v512
        %v538 = vadd.f32 %v417, %v515
        %v539 = vadd.f32 %v420, %v518
        %v540 = vadd.f32 %v423, %v521
        %v541 = vadd.f32 %v426, %v524
        %s542 = scalar_lea.vmem [#allocation2], 24
        %v543 = vld [vmem:[%s542] sm:$0xff]
        %v544 = vld [vmem:[%s542 + $0x8] sm:$0xff]
        %v545 = vld [vmem:[%s542 + $0x18] sm:$0xff]
        %v546 = vld [vmem:[%s542 + $0x20] sm:$0xff]
        %v547 = vld [vmem:[%s542 + $0x30] sm:$0xff]
        %v548 = vld [vmem:[%s542 + $0x38] sm:$0xff]
        %v549 = vld [vmem:[%s542 + $0x48] sm:$0xff]
        %v550 = vld [vmem:[%s542 + $0x50] sm:$0xff]
        %v551 = vld [vmem:[%s542 + $0x60] sm:$0xff]
        %v552 = vld [vmem:[%s542 + $0x68] sm:$0xff]
        %v553 = vld [vmem:[%s542 + $0x78] sm:$0xff]
        %v554 = vld [vmem:[%s542 + $0x80] sm:$0xff]
        %v555 = vld [vmem:[%s542 + $0x90] sm:$0xff]
        %v556 = vld [vmem:[%s542 + $0x98] sm:$0xff]
        %v557 = vld [vmem:[%s542 + $0xa8] sm:$0xff]
        %v558 = vld [vmem:[%s542 + $0xb0] sm:$0xff]
        %s559 = scalar_lea.vmem %s1, 384
        %v560 = vld [vmem:[%s559] sm:$0xff]
        %v561 = vld [vmem:[%s559 + $0x8] sm:$0xff]
        %v562 = vld [vmem:[%s559 + $0x10] sm:$0xff]
        %v563 = vld [vmem:[%s559 + $0x18] sm:$0xff]
        %v564 = vld [vmem:[%s559 + $0x20] sm:$0xff]
        %v565 = vld [vmem:[%s559 + $0x28] sm:$0xff]
        %v566 = vld [vmem:[%s559 + $0x30] sm:$0xff]
        %v567 = vld [vmem:[%s559 + $0x38] sm:$0xff]
        %v568 = vld [vmem:[%s559 + $0x40] sm:$0xff]
        %v569 = vld [vmem:[%s559 + $0x48] sm:$0xff]
        %v570 = vld [vmem:[%s559 + $0x50] sm:$0xff]
        %v571 = vld [vmem:[%s559 + $0x58] sm:$0xff]
        %v572 = vld [vmem:[%s559 + $0x60] sm:$0xff]
        %v573 = vld [vmem:[%s559 + $0x68] sm:$0xff]
        %v574 = vld [vmem:[%s559 + $0x70] sm:$0xff]
        %v575 = vld [vmem:[%s559 + $0x78] sm:$0xff]
        %576 = vmatpush.msra.mxu0 %v575
        %577 = vmatpush.msra.mxu0 %v574
        %578 = vmatpush.msra.mxu0 %v573
        %579 = vmatpush.msra.mxu0 %v572
        %580 = vmatpush.msra.mxu0 %v571
        %581 = vmatpush.msra.mxu0 %v570
        %582 = vmatpush.msra.mxu0 %v569
        %583 = vmatpush.msra.mxu0 %v568
        %584 = vmatpush.msra.mxu0 %v567
        %585 = vmatpush.msra.mxu0 %v566
        %586 = vmatpush.msra.mxu0 %v565
        %587 = vmatpush.msra.mxu0 %v564
        %588 = vmatpush.msra.mxu0 %v563
        %589 = vmatpush.msra.mxu0 %v562
        %590 = vmatpush.msra.mxu0 %v561
        %591 = vmatpush.msra.mxu0 %v560
        %592 = vmatmul.f32.gmra.mxu0 %v543
        %v593 = vpop.f32.mrf.mxu0
        %v594 = vadd.f32 0.0, %v593
        %595 = vmatmul.f32.gmra.mxu0 %v544
        %v596 = vpop.f32.mrf.mxu0
        %v597 = vadd.f32 0.0, %v596
        %598 = vmatmul.f32.gmra.mxu0 %v545
        %v599 = vpop.f32.mrf.mxu0
        %v600 = vadd.f32 0.0, %v599
        %601 = vmatmul.f32.gmra.mxu0 %v546
        %v602 = vpop.f32.mrf.mxu0
        %v603 = vadd.f32 0.0, %v602
        %604 = vmatmul.f32.gmra.mxu0 %v547
        %v605 = vpop.f32.mrf.mxu0
        %v606 = vadd.f32 0.0, %v605
        %607 = vmatmul.f32.gmra.mxu0 %v548
        %v608 = vpop.f32.mrf.mxu0
        %v609 = vadd.f32 0.0, %v608
        %610 = vmatmul.f32.gmra.mxu0 %v549
        %v611 = vpop.f32.mrf.mxu0
        %v612 = vadd.f32 0.0, %v611
        %613 = vmatmul.f32.gmra.mxu0 %v550
        %v614 = vpop.f32.mrf.mxu0
        %v615 = vadd.f32 0.0, %v614
        %616 = vmatmul.f32.gmra.mxu0 %v551
        %v617 = vpop.f32.mrf.mxu0
        %v618 = vadd.f32 0.0, %v617
        %619 = vmatmul.f32.gmra.mxu0 %v552
        %v620 = vpop.f32.mrf.mxu0
        %v621 = vadd.f32 0.0, %v620
        %622 = vmatmul.f32.gmra.mxu0 %v553
        %v623 = vpop.f32.mrf.mxu0
        %v624 = vadd.f32 0.0, %v623
        %625 = vmatmul.f32.gmra.mxu0 %v554
        %v626 = vpop.f32.mrf.mxu0
        %v627 = vadd.f32 0.0, %v626
        %628 = vmatmul.f32.gmra.mxu0 %v555
        %v629 = vpop.f32.mrf.mxu0
        %v630 = vadd.f32 0.0, %v629
        %631 = vmatmul.f32.gmra.mxu0 %v556
        %v632 = vpop.f32.mrf.mxu0
        %v633 = vadd.f32 0.0, %v632
        %634 = vmatmul.f32.gmra.mxu0 %v557
        %v635 = vpop.f32.mrf.mxu0
        %v636 = vadd.f32 0.0, %v635
        %637 = vmatmul.f32.gmra.mxu0 %v558
        %v638 = vpop.f32.mrf.mxu0
        %v639 = vadd.f32 0.0, %v638
        %640 = vdwg.mxu0
        %v641 = vadd.f32 %v526, %v594
        %v642 = vadd.f32 %v527, %v597
        %v643 = vadd.f32 %v528, %v600
        %v644 = vadd.f32 %v529, %v603
        %v645 = vadd.f32 %v530, %v606
        %v646 = vadd.f32 %v531, %v609
        %v647 = vadd.f32 %v532, %v612
        %v648 = vadd.f32 %v533, %v615
        %v649 = vadd.f32 %v534, %v618
        %v650 = vadd.f32 %v535, %v621
        %v651 = vadd.f32 %v536, %v624
        %v652 = vadd.f32 %v537, %v627
        %v653 = vadd.f32 %v538, %v630
        %v654 = vadd.f32 %v539, %v633
        %v655 = vadd.f32 %v540, %v636
        %v656 = vadd.f32 %v541, %v639
        %v657 = vld [vmem:[%s542 + $0x1] sm:$0xff]
        %v658 = vld [vmem:[%s542 + $0x9] sm:$0xff]
        %v659 = vld [vmem:[%s542 + $0x19] sm:$0xff]
        %v660 = vld [vmem:[%s542 + $0x21] sm:$0xff]
        %v661 = vld [vmem:[%s542 + $0x31] sm:$0xff]
        %v662 = vld [vmem:[%s542 + $0x39] sm:$0xff]
        %v663 = vld [vmem:[%s542 + $0x49] sm:$0xff]
        %v664 = vld [vmem:[%s542 + $0x51] sm:$0xff]
        %v665 = vld [vmem:[%s542 + $0x61] sm:$0xff]
        %v666 = vld [vmem:[%s542 + $0x69] sm:$0xff]
        %v667 = vld [vmem:[%s542 + $0x79] sm:$0xff]
        %v668 = vld [vmem:[%s542 + $0x81] sm:$0xff]
        %v669 = vld [vmem:[%s542 + $0x91] sm:$0xff]
        %v670 = vld [vmem:[%s542 + $0x99] sm:$0xff]
        %v671 = vld [vmem:[%s542 + $0xa9] sm:$0xff]
        %v672 = vld [vmem:[%s542 + $0xb1] sm:$0xff]
        %s673 = scalar_lea.vmem %s1, 512
        %v674 = vld [vmem:[%s673] sm:$0xff]
        %v675 = vld [vmem:[%s673 + $0x8] sm:$0xff]
        %v676 = vld [vmem:[%s673 + $0x10] sm:$0xff]
        %v677 = vld [vmem:[%s673 + $0x18] sm:$0xff]
        %v678 = vld [vmem:[%s673 + $0x20] sm:$0xff]
        %v679 = vld [vmem:[%s673 + $0x28] sm:$0xff]
        %v680 = vld [vmem:[%s673 + $0x30] sm:$0xff]
        %v681 = vld [vmem:[%s673 + $0x38] sm:$0xff]
        %v682 = vld [vmem:[%s673 + $0x40] sm:$0xff]
        %v683 = vld [vmem:[%s673 + $0x48] sm:$0xff]
        %v684 = vld [vmem:[%s673 + $0x50] sm:$0xff]
        %v685 = vld [vmem:[%s673 + $0x58] sm:$0xff]
        %v686 = vld [vmem:[%s673 + $0x60] sm:$0xff]
        %v687 = vld [vmem:[%s673 + $0x68] sm:$0xff]
        %v688 = vld [vmem:[%s673 + $0x70] sm:$0xff]
        %v689 = vld [vmem:[%s673 + $0x78] sm:$0xff]
        %690 = vmatpush.msra.mxu0 %v689
        %691 = vmatpush.msra.mxu0 %v688
        %692 = vmatpush.msra.mxu0 %v687
        %693 = vmatpush.msra.mxu0 %v686
        %694 = vmatpush.msra.mxu0 %v685
        %695 = vmatpush.msra.mxu0 %v684
        %696 = vmatpush.msra.mxu0 %v683
        %697 = vmatpush.msra.mxu0 %v682
        %698 = vmatpush.msra.mxu0 %v681
        %699 = vmatpush.msra.mxu0 %v680
        %700 = vmatpush.msra.mxu0 %v679
        %701 = vmatpush.msra.mxu0 %v678
        %702 = vmatpush.msra.mxu0 %v677
        %703 = vmatpush.msra.mxu0 %v676
        %704 = vmatpush.msra.mxu0 %v675
        %705 = vmatpush.msra.mxu0 %v674
        %706 = vmatmul.f32.gmra.mxu0 %v657
        %v707 = vpop.f32.mrf.mxu0
        %v708 = vadd.f32 0.0, %v707
        %709 = vmatmul.f32.gmra.mxu0 %v658
        %v710 = vpop.f32.mrf.mxu0
        %v711 = vadd.f32 0.0, %v710
        %712 = vmatmul.f32.gmra.mxu0 %v659
        %v713 = vpop.f32.mrf.mxu0
        %v714 = vadd.f32 0.0, %v713
        %715 = vmatmul.f32.gmra.mxu0 %v660
        %v716 = vpop.f32.mrf.mxu0
        %v717 = vadd.f32 0.0, %v716
        %718 = vmatmul.f32.gmra.mxu0 %v661
        %v719 = vpop.f32.mrf.mxu0
        %v720 = vadd.f32 0.0, %v719
        %721 = vmatmul.f32.gmra.mxu0 %v662
        %v722 = vpop.f32.mrf.mxu0
        %v723 = vadd.f32 0.0, %v722
        %724 = vmatmul.f32.gmra.mxu0 %v663
        %v725 = vpop.f32.mrf.mxu0
        %v726 = vadd.f32 0.0, %v725
        %727 = vmatmul.f32.gmra.mxu0 %v664
        %v728 = vpop.f32.mrf.mxu0
        %v729 = vadd.f32 0.0, %v728
        %730 = vmatmul.f32.gmra.mxu0 %v665
        %v731 = vpop.f32.mrf.mxu0
        %v732 = vadd.f32 0.0, %v731
        %733 = vmatmul.f32.gmra.mxu0 %v666
        %v734 = vpop.f32.mrf.mxu0
        %v735 = vadd.f32 0.0, %v734
        %736 = vmatmul.f32.gmra.mxu0 %v667
        %v737 = vpop.f32.mrf.mxu0
        %v738 = vadd.f32 0.0, %v737
        %739 = vmatmul.f32.gmra.mxu0 %v668
        %v740 = vpop.f32.mrf.mxu0
        %v741 = vadd.f32 0.0, %v740
        %742 = vmatmul.f32.gmra.mxu0 %v669
        %v743 = vpop.f32.mrf.mxu0
        %v744 = vadd.f32 0.0, %v743
        %745 = vmatmul.f32.gmra.mxu0 %v670
        %v746 = vpop.f32.mrf.mxu0
        %v747 = vadd.f32 0.0, %v746
        %748 = vmatmul.f32.gmra.mxu0 %v671
        %v749 = vpop.f32.mrf.mxu0
        %v750 = vadd.f32 0.0, %v749
        %751 = vmatmul.f32.gmra.mxu0 %v672
        %v752 = vpop.f32.mrf.mxu0
        %v753 = vadd.f32 0.0, %v752
        %754 = vdwg.mxu0
        %v755 = vadd.f32 %v641, %v708
        %v756 = vadd.f32 %v642, %v711
        %v757 = vadd.f32 %v643, %v714
        %v758 = vadd.f32 %v644, %v717
        %v759 = vadd.f32 %v645, %v720
        %v760 = vadd.f32 %v646, %v723
        %v761 = vadd.f32 %v647, %v726
        %v762 = vadd.f32 %v648, %v729
        %v763 = vadd.f32 %v649, %v732
        %v764 = vadd.f32 %v650, %v735
        %v765 = vadd.f32 %v651, %v738
        %v766 = vadd.f32 %v652, %v741
        %v767 = vadd.f32 %v653, %v744
        %v768 = vadd.f32 %v654, %v747
        %v769 = vadd.f32 %v655, %v750
        %v770 = vadd.f32 %v656, %v753
        %v771 = vld [vmem:[%s542 + $0x2] sm:$0xff]
        %v772 = vld [vmem:[%s542 + $0xa] sm:$0xff]
        %v773 = vld [vmem:[%s542 + $0x1a] sm:$0xff]
        %v774 = vld [vmem:[%s542 + $0x22] sm:$0xff]
        %v775 = vld [vmem:[%s542 + $0x32] sm:$0xff]
        %v776 = vld [vmem:[%s542 + $0x3a] sm:$0xff]
        %v777 = vld [vmem:[%s542 + $0x4a] sm:$0xff]
        %v778 = vld [vmem:[%s542 + $0x52] sm:$0xff]
        %v779 = vld [vmem:[%s542 + $0x62] sm:$0xff]
        %v780 = vld [vmem:[%s542 + $0x6a] sm:$0xff]
        %v781 = vld [vmem:[%s542 + $0x7a] sm:$0xff]
        %v782 = vld [vmem:[%s542 + $0x82] sm:$0xff]
        %v783 = vld [vmem:[%s542 + $0x92] sm:$0xff]
        %v784 = vld [vmem:[%s542 + $0x9a] sm:$0xff]
        %v785 = vld [vmem:[%s542 + $0xaa] sm:$0xff]
        %v786 = vld [vmem:[%s542 + $0xb2] sm:$0xff]
        %s787 = scalar_lea.vmem %s1, 640
        %v788 = vld [vmem:[%s787] sm:$0xff]
        %v789 = vld [vmem:[%s787 + $0x8] sm:$0xff]
        %v790 = vld [vmem:[%s787 + $0x10] sm:$0xff]
        %v791 = vld [vmem:[%s787 + $0x18] sm:$0xff]
        %v792 = vld [vmem:[%s787 + $0x20] sm:$0xff]
        %v793 = vld [vmem:[%s787 + $0x28] sm:$0xff]
        %v794 = vld [vmem:[%s787 + $0x30] sm:$0xff]
        %v795 = vld [vmem:[%s787 + $0x38] sm:$0xff]
        %v796 = vld [vmem:[%s787 + $0x40] sm:$0xff]
        %v797 = vld [vmem:[%s787 + $0x48] sm:$0xff]
        %v798 = vld [vmem:[%s787 + $0x50] sm:$0xff]
        %v799 = vld [vmem:[%s787 + $0x58] sm:$0xff]
        %v800 = vld [vmem:[%s787 + $0x60] sm:$0xff]
        %v801 = vld [vmem:[%s787 + $0x68] sm:$0xff]
        %v802 = vld [vmem:[%s787 + $0x70] sm:$0xff]
        %v803 = vld [vmem:[%s787 + $0x78] sm:$0xff]
        %804 = vmatpush.msra.mxu0 %v803
        %805 = vmatpush.msra.mxu0 %v802
        %806 = vmatpush.msra.mxu0 %v801
        %807 = vmatpush.msra.mxu0 %v800
        %808 = vmatpush.msra.mxu0 %v799
        %809 = vmatpush.msra.mxu0 %v798
        %810 = vmatpush.msra.mxu0 %v797
        %811 = vmatpush.msra.mxu0 %v796
        %812 = vmatpush.msra.mxu0 %v795
        %813 = vmatpush.msra.mxu0 %v794
        %814 = vmatpush.msra.mxu0 %v793
        %815 = vmatpush.msra.mxu0 %v792
        %816 = vmatpush.msra.mxu0 %v791
        %817 = vmatpush.msra.mxu0 %v790
        %818 = vmatpush.msra.mxu0 %v789
        %819 = vmatpush.msra.mxu0 %v788
        %820 = vmatmul.f32.gmra.mxu0 %v771
        %v821 = vpop.f32.mrf.mxu0
        %v822 = vadd.f32 0.0, %v821
        %823 = vmatmul.f32.gmra.mxu0 %v772
        %v824 = vpop.f32.mrf.mxu0
        %v825 = vadd.f32 0.0, %v824
        %826 = vmatmul.f32.gmra.mxu0 %v773
        %v827 = vpop.f32.mrf.mxu0
        %v828 = vadd.f32 0.0, %v827
        %829 = vmatmul.f32.gmra.mxu0 %v774
        %v830 = vpop.f32.mrf.mxu0
        %v831 = vadd.f32 0.0, %v830
        %832 = vmatmul.f32.gmra.mxu0 %v775
        %v833 = vpop.f32.mrf.mxu0
        %v834 = vadd.f32 0.0, %v833
        %835 = vmatmul.f32.gmra.mxu0 %v776
        %v836 = vpop.f32.mrf.mxu0
        %v837 = vadd.f32 0.0, %v836
        %838 = vmatmul.f32.gmra.mxu0 %v777
        %v839 = vpop.f32.mrf.mxu0
        %v840 = vadd.f32 0.0, %v839
        %841 = vmatmul.f32.gmra.mxu0 %v778
        %v842 = vpop.f32.mrf.mxu0
        %v843 = vadd.f32 0.0, %v842
        %844 = vmatmul.f32.gmra.mxu0 %v779
        %v845 = vpop.f32.mrf.mxu0
        %v846 = vadd.f32 0.0, %v845
        %847 = vmatmul.f32.gmra.mxu0 %v780
        %v848 = vpop.f32.mrf.mxu0
        %v849 = vadd.f32 0.0, %v848
        %850 = vmatmul.f32.gmra.mxu0 %v781
        %v851 = vpop.f32.mrf.mxu0
        %v852 = vadd.f32 0.0, %v851
        %853 = vmatmul.f32.gmra.mxu0 %v782
        %v854 = vpop.f32.mrf.mxu0
        %v855 = vadd.f32 0.0, %v854
        %856 = vmatmul.f32.gmra.mxu0 %v783
        %v857 = vpop.f32.mrf.mxu0
        %v858 = vadd.f32 0.0, %v857
        %859 = vmatmul.f32.gmra.mxu0 %v784
        %v860 = vpop.f32.mrf.mxu0
        %v861 = vadd.f32 0.0, %v860
        %862 = vmatmul.f32.gmra.mxu0 %v785
        %v863 = vpop.f32.mrf.mxu0
        %v864 = vadd.f32 0.0, %v863
        %865 = vmatmul.f32.gmra.mxu0 %v786
        %v866 = vpop.f32.mrf.mxu0
        %v867 = vadd.f32 0.0, %v866
        %868 = vdwg.mxu0
        %v869 = vadd.f32 %v755, %v822
        %v870 = vadd.f32 %v756, %v825
        %v871 = vadd.f32 %v757, %v828
        %v872 = vadd.f32 %v758, %v831
        %v873 = vadd.f32 %v759, %v834
        %v874 = vadd.f32 %v760, %v837
        %v875 = vadd.f32 %v761, %v840
        %v876 = vadd.f32 %v762, %v843
        %v877 = vadd.f32 %v763, %v846
        %v878 = vadd.f32 %v764, %v849
        %v879 = vadd.f32 %v765, %v852
        %v880 = vadd.f32 %v766, %v855
        %v881 = vadd.f32 %v767, %v858
        %v882 = vadd.f32 %v768, %v861
        %v883 = vadd.f32 %v769, %v864
        %v884 = vadd.f32 %v770, %v867
        %s885 = scalar_lea.vmem [#allocation2], 48
        %v886 = vld [vmem:[%s885] sm:$0xff]
        %v887 = vld [vmem:[%s885 + $0x8] sm:$0xff]
        %v888 = vld [vmem:[%s885 + $0x18] sm:$0xff]
        %v889 = vld [vmem:[%s885 + $0x20] sm:$0xff]
        %v890 = vld [vmem:[%s885 + $0x30] sm:$0xff]
        %v891 = vld [vmem:[%s885 + $0x38] sm:$0xff]
        %v892 = vld [vmem:[%s885 + $0x48] sm:$0xff]
        %v893 = vld [vmem:[%s885 + $0x50] sm:$0xff]
        %v894 = vld [vmem:[%s885 + $0x60] sm:$0xff]
        %v895 = vld [vmem:[%s885 + $0x68] sm:$0xff]
        %v896 = vld [vmem:[%s885 + $0x78] sm:$0xff]
        %v897 = vld [vmem:[%s885 + $0x80] sm:$0xff]
        %v898 = vld [vmem:[%s885 + $0x90] sm:$0xff]
        %v899 = vld [vmem:[%s885 + $0x98] sm:$0xff]
        %v900 = vld [vmem:[%s885 + $0xa8] sm:$0xff]
        %v901 = vld [vmem:[%s885 + $0xb0] sm:$0xff]
        %s902 = scalar_lea.vmem %s1, 768
        %v903 = vld [vmem:[%s902] sm:$0xff]
        %v904 = vld [vmem:[%s902 + $0x8] sm:$0xff]
        %v905 = vld [vmem:[%s902 + $0x10] sm:$0xff]
        %v906 = vld [vmem:[%s902 + $0x18] sm:$0xff]
        %v907 = vld [vmem:[%s902 + $0x20] sm:$0xff]
        %v908 = vld [vmem:[%s902 + $0x28] sm:$0xff]
        %v909 = vld [vmem:[%s902 + $0x30] sm:$0xff]
        %v910 = vld [vmem:[%s902 + $0x38] sm:$0xff]
        %v911 = vld [vmem:[%s902 + $0x40] sm:$0xff]
        %v912 = vld [vmem:[%s902 + $0x48] sm:$0xff]
        %v913 = vld [vmem:[%s902 + $0x50] sm:$0xff]
        %v914 = vld [vmem:[%s902 + $0x58] sm:$0xff]
        %v915 = vld [vmem:[%s902 + $0x60] sm:$0xff]
        %v916 = vld [vmem:[%s902 + $0x68] sm:$0xff]
        %v917 = vld [vmem:[%s902 + $0x70] sm:$0xff]
        %v918 = vld [vmem:[%s902 + $0x78] sm:$0xff]
        %919 = vmatpush.msra.mxu0 %v918
        %920 = vmatpush.msra.mxu0 %v917
        %921 = vmatpush.msra.mxu0 %v916
        %922 = vmatpush.msra.mxu0 %v915
        %923 = vmatpush.msra.mxu0 %v914
        %924 = vmatpush.msra.mxu0 %v913
        %925 = vmatpush.msra.mxu0 %v912
        %926 = vmatpush.msra.mxu0 %v911
        %927 = vmatpush.msra.mxu0 %v910
        %928 = vmatpush.msra.mxu0 %v909
        %929 = vmatpush.msra.mxu0 %v908
        %930 = vmatpush.msra.mxu0 %v907
        %931 = vmatpush.msra.mxu0 %v906
        %932 = vmatpush.msra.mxu0 %v905
        %933 = vmatpush.msra.mxu0 %v904
        %934 = vmatpush.msra.mxu0 %v903
        %935 = vmatmul.f32.gmra.mxu0 %v886
        %v936 = vpop.f32.mrf.mxu0
        %v937 = vadd.f32 0.0, %v936
        %938 = vmatmul.f32.gmra.mxu0 %v887
        %v939 = vpop.f32.mrf.mxu0
        %v940 = vadd.f32 0.0, %v939
        %941 = vmatmul.f32.gmra.mxu0 %v888
        %v942 = vpop.f32.mrf.mxu0
        %v943 = vadd.f32 0.0, %v942
        %944 = vmatmul.f32.gmra.mxu0 %v889
        %v945 = vpop.f32.mrf.mxu0
        %v946 = vadd.f32 0.0, %v945
        %947 = vmatmul.f32.gmra.mxu0 %v890
        %v948 = vpop.f32.mrf.mxu0
        %v949 = vadd.f32 0.0, %v948
        %950 = vmatmul.f32.gmra.mxu0 %v891
        %v951 = vpop.f32.mrf.mxu0
        %v952 = vadd.f32 0.0, %v951
        %953 = vmatmul.f32.gmra.mxu0 %v892
        %v954 = vpop.f32.mrf.mxu0
        %v955 = vadd.f32 0.0, %v954
        %956 = vmatmul.f32.gmra.mxu0 %v893
        %v957 = vpop.f32.mrf.mxu0
        %v958 = vadd.f32 0.0, %v957
        %959 = vmatmul.f32.gmra.mxu0 %v894
        %v960 = vpop.f32.mrf.mxu0
        %v961 = vadd.f32 0.0, %v960
        %962 = vmatmul.f32.gmra.mxu0 %v895
        %v963 = vpop.f32.mrf.mxu0
        %v964 = vadd.f32 0.0, %v963
        %965 = vmatmul.f32.gmra.mxu0 %v896
        %v966 = vpop.f32.mrf.mxu0
        %v967 = vadd.f32 0.0, %v966
        %968 = vmatmul.f32.gmra.mxu0 %v897
        %v969 = vpop.f32.mrf.mxu0
        %v970 = vadd.f32 0.0, %v969
        %971 = vmatmul.f32.gmra.mxu0 %v898
        %v972 = vpop.f32.mrf.mxu0
        %v973 = vadd.f32 0.0, %v972
        %974 = vmatmul.f32.gmra.mxu0 %v899
        %v975 = vpop.f32.mrf.mxu0
        %v976 = vadd.f32 0.0, %v975
        %977 = vmatmul.f32.gmra.mxu0 %v900
        %v978 = vpop.f32.mrf.mxu0
        %v979 = vadd.f32 0.0, %v978
        %980 = vmatmul.f32.gmra.mxu0 %v901
        %v981 = vpop.f32.mrf.mxu0
        %v982 = vadd.f32 0.0, %v981
        %983 = vdwg.mxu0
        %v984 = vadd.f32 %v869, %v937
        %v985 = vadd.f32 %v870, %v940
        %v986 = vadd.f32 %v871, %v943
        %v987 = vadd.f32 %v872, %v946
        %v988 = vadd.f32 %v873, %v949
        %v989 = vadd.f32 %v874, %v952
        %v990 = vadd.f32 %v875, %v955
        %v991 = vadd.f32 %v876, %v958
        %v992 = vadd.f32 %v877, %v961
        %v993 = vadd.f32 %v878, %v964
        %v994 = vadd.f32 %v879, %v967
        %v995 = vadd.f32 %v880, %v970
        %v996 = vadd.f32 %v881, %v973
        %v997 = vadd.f32 %v882, %v976
        %v998 = vadd.f32 %v883, %v979
        %v999 = vadd.f32 %v884, %v982
        %v1000 = vld [vmem:[%s885 + $0x1] sm:$0xff]
        %v1001 = vld [vmem:[%s885 + $0x9] sm:$0xff]
        %v1002 = vld [vmem:[%s885 + $0x19] sm:$0xff]
        %v1003 = vld [vmem:[%s885 + $0x21] sm:$0xff]
        %v1004 = vld [vmem:[%s885 + $0x31] sm:$0xff]
        %v1005 = vld [vmem:[%s885 + $0x39] sm:$0xff]
        %v1006 = vld [vmem:[%s885 + $0x49] sm:$0xff]
        %v1007 = vld [vmem:[%s885 + $0x51] sm:$0xff]
        %v1008 = vld [vmem:[%s885 + $0x61] sm:$0xff]
        %v1009 = vld [vmem:[%s885 + $0x69] sm:$0xff]
        %v1010 = vld [vmem:[%s885 + $0x79] sm:$0xff]
        %v1011 = vld [vmem:[%s885 + $0x81] sm:$0xff]
        %v1012 = vld [vmem:[%s885 + $0x91] sm:$0xff]
        %v1013 = vld [vmem:[%s885 + $0x99] sm:$0xff]
        %v1014 = vld [vmem:[%s885 + $0xa9] sm:$0xff]
        %v1015 = vld [vmem:[%s885 + $0xb1] sm:$0xff]
        %s1016 = scalar_lea.vmem %s1, 896
        %v1017 = vld [vmem:[%s1016] sm:$0xff]
        %v1018 = vld [vmem:[%s1016 + $0x8] sm:$0xff]
        %v1019 = vld [vmem:[%s1016 + $0x10] sm:$0xff]
        %v1020 = vld [vmem:[%s1016 + $0x18] sm:$0xff]
        %v1021 = vld [vmem:[%s1016 + $0x20] sm:$0xff]
        %v1022 = vld [vmem:[%s1016 + $0x28] sm:$0xff]
        %v1023 = vld [vmem:[%s1016 + $0x30] sm:$0xff]
        %v1024 = vld [vmem:[%s1016 + $0x38] sm:$0xff]
        %v1025 = vld [vmem:[%s1016 + $0x40] sm:$0xff]
        %v1026 = vld [vmem:[%s1016 + $0x48] sm:$0xff]
        %v1027 = vld [vmem:[%s1016 + $0x50] sm:$0xff]
        %v1028 = vld [vmem:[%s1016 + $0x58] sm:$0xff]
        %v1029 = vld [vmem:[%s1016 + $0x60] sm:$0xff]
        %v1030 = vld [vmem:[%s1016 + $0x68] sm:$0xff]
        %v1031 = vld [vmem:[%s1016 + $0x70] sm:$0xff]
        %v1032 = vld [vmem:[%s1016 + $0x78] sm:$0xff]
        %1033 = vmatpush.msra.mxu0 %v1032
        %1034 = vmatpush.msra.mxu0 %v1031
        %1035 = vmatpush.msra.mxu0 %v1030
        %1036 = vmatpush.msra.mxu0 %v1029
        %1037 = vmatpush.msra.mxu0 %v1028
        %1038 = vmatpush.msra.mxu0 %v1027
        %1039 = vmatpush.msra.mxu0 %v1026
        %1040 = vmatpush.msra.mxu0 %v1025
        %1041 = vmatpush.msra.mxu0 %v1024
        %1042 = vmatpush.msra.mxu0 %v1023
        %1043 = vmatpush.msra.mxu0 %v1022
        %1044 = vmatpush.msra.mxu0 %v1021
        %1045 = vmatpush.msra.mxu0 %v1020
        %1046 = vmatpush.msra.mxu0 %v1019
        %1047 = vmatpush.msra.mxu0 %v1018
        %1048 = vmatpush.msra.mxu0 %v1017
        %1049 = vmatmul.f32.gmra.mxu0 %v1000
        %v1050 = vpop.f32.mrf.mxu0
        %v1051 = vadd.f32 0.0, %v1050
        %1052 = vmatmul.f32.gmra.mxu0 %v1001
        %v1053 = vpop.f32.mrf.mxu0
        %v1054 = vadd.f32 0.0, %v1053
        %1055 = vmatmul.f32.gmra.mxu0 %v1002
        %v1056 = vpop.f32.mrf.mxu0
        %v1057 = vadd.f32 0.0, %v1056
        %1058 = vmatmul.f32.gmra.mxu0 %v1003
        %v1059 = vpop.f32.mrf.mxu0
        %v1060 = vadd.f32 0.0, %v1059
        %1061 = vmatmul.f32.gmra.mxu0 %v1004
        %v1062 = vpop.f32.mrf.mxu0
        %v1063 = vadd.f32 0.0, %v1062
        %1064 = vmatmul.f32.gmra.mxu0 %v1005
        %v1065 = vpop.f32.mrf.mxu0
        %v1066 = vadd.f32 0.0, %v1065
        %1067 = vmatmul.f32.gmra.mxu0 %v1006
        %v1068 = vpop.f32.mrf.mxu0
        %v1069 = vadd.f32 0.0, %v1068
        %1070 = vmatmul.f32.gmra.mxu0 %v1007
        %v1071 = vpop.f32.mrf.mxu0
        %v1072 = vadd.f32 0.0, %v1071
        %1073 = vmatmul.f32.gmra.mxu0 %v1008
        %v1074 = vpop.f32.mrf.mxu0
        %v1075 = vadd.f32 0.0, %v1074
        %1076 = vmatmul.f32.gmra.mxu0 %v1009
        %v1077 = vpop.f32.mrf.mxu0
        %v1078 = vadd.f32 0.0, %v1077
        %1079 = vmatmul.f32.gmra.mxu0 %v1010
        %v1080 = vpop.f32.mrf.mxu0
        %v1081 = vadd.f32 0.0, %v1080
        %1082 = vmatmul.f32.gmra.mxu0 %v1011
        %v1083 = vpop.f32.mrf.mxu0
        %v1084 = vadd.f32 0.0, %v1083
        %1085 = vmatmul.f32.gmra.mxu0 %v1012
        %v1086 = vpop.f32.mrf.mxu0
        %v1087 = vadd.f32 0.0, %v1086
        %1088 = vmatmul.f32.gmra.mxu0 %v1013
        %v1089 = vpop.f32.mrf.mxu0
        %v1090 = vadd.f32 0.0, %v1089
        %1091 = vmatmul.f32.gmra.mxu0 %v1014
        %v1092 = vpop.f32.mrf.mxu0
        %v1093 = vadd.f32 0.0, %v1092
        %1094 = vmatmul.f32.gmra.mxu0 %v1015
        %v1095 = vpop.f32.mrf.mxu0
        %v1096 = vadd.f32 0.0, %v1095
        %1097 = vdwg.mxu0
        %v1098 = vadd.f32 %v984, %v1051
        %v1099 = vadd.f32 %v985, %v1054
        %v1100 = vadd.f32 %v986, %v1057
        %v1101 = vadd.f32 %v987, %v1060
        %v1102 = vadd.f32 %v988, %v1063
        %v1103 = vadd.f32 %v989, %v1066
        %v1104 = vadd.f32 %v990, %v1069
        %v1105 = vadd.f32 %v991, %v1072
        %v1106 = vadd.f32 %v992, %v1075
        %v1107 = vadd.f32 %v993, %v1078
        %v1108 = vadd.f32 %v994, %v1081
        %v1109 = vadd.f32 %v995, %v1084
        %v1110 = vadd.f32 %v996, %v1087
        %v1111 = vadd.f32 %v997, %v1090
        %v1112 = vadd.f32 %v998, %v1093
        %v1113 = vadd.f32 %v999, %v1096
        %v1114 = vld [vmem:[%s885 + $0x2] sm:$0xff]
        %v1115 = vld [vmem:[%s885 + $0xa] sm:$0xff]
        %v1116 = vld [vmem:[%s885 + $0x1a] sm:$0xff]
        %v1117 = vld [vmem:[%s885 + $0x22] sm:$0xff]
        %v1118 = vld [vmem:[%s885 + $0x32] sm:$0xff]
        %v1119 = vld [vmem:[%s885 + $0x3a] sm:$0xff]
        %v1120 = vld [vmem:[%s885 + $0x4a] sm:$0xff]
        %v1121 = vld [vmem:[%s885 + $0x52] sm:$0xff]
        %v1122 = vld [vmem:[%s885 + $0x62] sm:$0xff]
        %v1123 = vld [vmem:[%s885 + $0x6a] sm:$0xff]
        %v1124 = vld [vmem:[%s885 + $0x7a] sm:$0xff]
        %v1125 = vld [vmem:[%s885 + $0x82] sm:$0xff]
        %v1126 = vld [vmem:[%s885 + $0x92] sm:$0xff]
        %v1127 = vld [vmem:[%s885 + $0x9a] sm:$0xff]
        %v1128 = vld [vmem:[%s885 + $0xaa] sm:$0xff]
        %v1129 = vld [vmem:[%s885 + $0xb2] sm:$0xff]
        %s1130 = scalar_lea.vmem %s1, 1024
        %v1131 = vld [vmem:[%s1130] sm:$0xff]
        %v1132 = vld [vmem:[%s1130 + $0x8] sm:$0xff]
        %v1133 = vld [vmem:[%s1130 + $0x10] sm:$0xff]
        %v1134 = vld [vmem:[%s1130 + $0x18] sm:$0xff]
        %v1135 = vld [vmem:[%s1130 + $0x20] sm:$0xff]
        %v1136 = vld [vmem:[%s1130 + $0x28] sm:$0xff]
        %v1137 = vld [vmem:[%s1130 + $0x30] sm:$0xff]
        %v1138 = vld [vmem:[%s1130 + $0x38] sm:$0xff]
        %v1139 = vld [vmem:[%s1130 + $0x40] sm:$0xff]
        %v1140 = vld [vmem:[%s1130 + $0x48] sm:$0xff]
        %v1141 = vld [vmem:[%s1130 + $0x50] sm:$0xff]
        %v1142 = vld [vmem:[%s1130 + $0x58] sm:$0xff]
        %v1143 = vld [vmem:[%s1130 + $0x60] sm:$0xff]
        %v1144 = vld [vmem:[%s1130 + $0x68] sm:$0xff]
        %v1145 = vld [vmem:[%s1130 + $0x70] sm:$0xff]
        %v1146 = vld [vmem:[%s1130 + $0x78] sm:$0xff]
        %1147 = vmatpush.msra.mxu0 %v1146
        %1148 = vmatpush.msra.mxu0 %v1145
        %1149 = vmatpush.msra.mxu0 %v1144
        %1150 = vmatpush.msra.mxu0 %v1143
        %1151 = vmatpush.msra.mxu0 %v1142
        %1152 = vmatpush.msra.mxu0 %v1141
        %1153 = vmatpush.msra.mxu0 %v1140
        %1154 = vmatpush.msra.mxu0 %v1139
        %1155 = vmatpush.msra.mxu0 %v1138
        %1156 = vmatpush.msra.mxu0 %v1137
        %1157 = vmatpush.msra.mxu0 %v1136
        %1158 = vmatpush.msra.mxu0 %v1135
        %1159 = vmatpush.msra.mxu0 %v1134
        %1160 = vmatpush.msra.mxu0 %v1133
        %1161 = vmatpush.msra.mxu0 %v1132
        %1162 = vmatpush.msra.mxu0 %v1131
        %1163 = vmatmul.f32.gmra.mxu0 %v1114
        %v1164 = vpop.f32.mrf.mxu0
        %v1165 = vadd.f32 0.0, %v1164
        %1166 = vmatmul.f32.gmra.mxu0 %v1115
        %v1167 = vpop.f32.mrf.mxu0
        %v1168 = vadd.f32 0.0, %v1167
        %1169 = vmatmul.f32.gmra.mxu0 %v1116
        %v1170 = vpop.f32.mrf.mxu0
        %v1171 = vadd.f32 0.0, %v1170
        %1172 = vmatmul.f32.gmra.mxu0 %v1117
        %v1173 = vpop.f32.mrf.mxu0
        %v1174 = vadd.f32 0.0, %v1173
        %1175 = vmatmul.f32.gmra.mxu0 %v1118
        %v1176 = vpop.f32.mrf.mxu0
        %v1177 = vadd.f32 0.0, %v1176
        %1178 = vmatmul.f32.gmra.mxu0 %v1119
        %v1179 = vpop.f32.mrf.mxu0
        %v1180 = vadd.f32 0.0, %v1179
        %1181 = vmatmul.f32.gmra.mxu0 %v1120
        %v1182 = vpop.f32.mrf.mxu0
        %v1183 = vadd.f32 0.0, %v1182
        %1184 = vmatmul.f32.gmra.mxu0 %v1121
        %v1185 = vpop.f32.mrf.mxu0
        %v1186 = vadd.f32 0.0, %v1185
        %1187 = vmatmul.f32.gmra.mxu0 %v1122
        %v1188 = vpop.f32.mrf.mxu0
        %v1189 = vadd.f32 0.0, %v1188
        %1190 = vmatmul.f32.gmra.mxu0 %v1123
        %v1191 = vpop.f32.mrf.mxu0
        %v1192 = vadd.f32 0.0, %v1191
        %1193 = vmatmul.f32.gmra.mxu0 %v1124
        %v1194 = vpop.f32.mrf.mxu0
        %v1195 = vadd.f32 0.0, %v1194
        %1196 = vmatmul.f32.gmra.mxu0 %v1125
        %v1197 = vpop.f32.mrf.mxu0
        %v1198 = vadd.f32 0.0, %v1197
        %1199 = vmatmul.f32.gmra.mxu0 %v1126
        %v1200 = vpop.f32.mrf.mxu0
        %v1201 = vadd.f32 0.0, %v1200
        %1202 = vmatmul.f32.gmra.mxu0 %v1127
        %v1203 = vpop.f32.mrf.mxu0
        %v1204 = vadd.f32 0.0, %v1203
        %1205 = vmatmul.f32.gmra.mxu0 %v1128
        %v1206 = vpop.f32.mrf.mxu0
        %v1207 = vadd.f32 0.0, %v1206
        %1208 = vmatmul.f32.gmra.mxu0 %v1129
        %v1209 = vpop.f32.mrf.mxu0
        %v1210 = vadd.f32 0.0, %v1209
        %1211 = vdwg.mxu0
        %v1212 = vadd.f32 %v1098, %v1165
        %v1213 = vadd.f32 %v1099, %v1168
        %v1214 = vadd.f32 %v1100, %v1171
        %v1215 = vadd.f32 %v1101, %v1174
        %v1216 = vadd.f32 %v1102, %v1177
        %v1217 = vadd.f32 %v1103, %v1180
        %v1218 = vadd.f32 %v1104, %v1183
        %v1219 = vadd.f32 %v1105, %v1186
        %v1220 = vadd.f32 %v1106, %v1189
        %v1221 = vadd.f32 %v1107, %v1192
        %v1222 = vadd.f32 %v1108, %v1195
        %v1223 = vadd.f32 %v1109, %v1198
        %v1224 = vadd.f32 %v1110, %v1201
        %v1225 = vadd.f32 %v1111, %v1204
        %v1226 = vadd.f32 %v1112, %v1207
        %v1227 = vadd.f32 %v1113, %v1210
        %v1228 = vld [vmem:[%s2] sm:$0x1]
        %v1230 = vperm.slane %v1228, 0
        %v1232 = vadd.f32 %v1212, %v1230
        %v1233 = vadd.f32 %v1213, %v1230
        %v1234 = vadd.f32 %v1214, %v1230
        %v1235 = vadd.f32 %v1215, %v1230
        %v1236 = vadd.f32 %v1216, %v1230
        %v1237 = vadd.f32 %v1217, %v1230
        %v1238 = vadd.f32 %v1218, %v1230
        %v1239 = vadd.f32 %v1219, %v1230
        %v1240 = vadd.f32 %v1220, %v1230
        %v1241 = vadd.f32 %v1221, %v1230
        %v1242 = vadd.f32 %v1222, %v1230
        %v1243 = vadd.f32 %v1223, %v1230
        %v1244 = vadd.f32 %v1224, %v1230
        %v1245 = vadd.f32 %v1225, %v1230
        %v1246 = vadd.f32 %v1226, %v1230
        %v1247 = vadd.f32 %v1227, %v1230
        %vm1248 = vcmp.ge.f32.partialorder %v1232, 0.0
        %vm1249 = vcmp.ge.f32.partialorder %v1233, 0.0
        %vm1250 = vcmp.ge.f32.partialorder %v1234, 0.0
        %vm1251 = vcmp.ge.f32.partialorder %v1235, 0.0
        %vm1252 = vcmp.ge.f32.partialorder %v1236, 0.0
        %vm1253 = vcmp.ge.f32.partialorder %v1237, 0.0
        %vm1254 = vcmp.ge.f32.partialorder %v1238, 0.0
        %vm1255 = vcmp.ge.f32.partialorder %v1239, 0.0
        %vm1256 = vcmp.ge.f32.partialorder %v1240, 0.0
        %vm1257 = vcmp.ge.f32.partialorder %v1241, 0.0
        %vm1258 = vcmp.ge.f32.partialorder %v1242, 0.0
        %vm1259 = vcmp.ge.f32.partialorder %v1243, 0.0
        %vm1260 = vcmp.ge.f32.partialorder %v1244, 0.0
        %vm1261 = vcmp.ge.f32.partialorder %v1245, 0.0
        %vm1262 = vcmp.ge.f32.partialorder %v1246, 0.0
        %vm1263 = vcmp.ge.f32.partialorder %v1247, 0.0
        %v1264 = vmul.f32 %v1232, 0.2
        %v1265 = vmul.f32 %v1233, 0.2
        %v1266 = vmul.f32 %v1234, 0.2
        %v1267 = vmul.f32 %v1235, 0.2
        %v1268 = vmul.f32 %v1236, 0.2
        %v1269 = vmul.f32 %v1237, 0.2
        %v1270 = vmul.f32 %v1238, 0.2
        %v1271 = vmul.f32 %v1239, 0.2
        %v1272 = vmul.f32 %v1240, 0.2
        %v1273 = vmul.f32 %v1241, 0.2
        %v1274 = vmul.f32 %v1242, 0.2
        %v1275 = vmul.f32 %v1243, 0.2
        %v1276 = vmul.f32 %v1244, 0.2
        %v1277 = vmul.f32 %v1245, 0.2
        %v1278 = vmul.f32 %v1246, 0.2
        %v1279 = vmul.f32 %v1247, 0.2
        %v1280 = vsel %vm1248, %v1232, %v1264
        %v1281 = vsel %vm1249, %v1233, %v1265
        %v1282 = vsel %vm1250, %v1234, %v1266
        %v1283 = vsel %vm1251, %v1235, %v1267
        %v1284 = vsel %vm1252, %v1236, %v1268
        %v1285 = vsel %vm1253, %v1237, %v1269
        %v1286 = vsel %vm1254, %v1238, %v1270
        %v1287 = vsel %vm1255, %v1239, %v1271
        %v1288 = vsel %vm1256, %v1240, %v1272
        %v1289 = vsel %vm1257, %v1241, %v1273
        %v1290 = vsel %vm1258, %v1242, %v1274
        %v1291 = vsel %vm1259, %v1243, %v1275
        %v1292 = vsel %vm1260, %v1244, %v1276
        %v1293 = vsel %vm1261, %v1245, %v1277
        %v1294 = vsel %vm1262, %v1246, %v1278
        %v1295 = vsel %vm1263, %v1247, %v1279
        %1296 = vst [vmem:[%s136] sm:$0xff] %v1280
        %1297 = vst [vmem:[%s136 + $0x8] sm:$0xff] %v1281
        %1298 = vst [vmem:[%s136 + $0x10] sm:$0xff] %v1282
        %1299 = vst [vmem:[%s136 + $0x18] sm:$0xff] %v1283
        %1300 = vst [vmem:[%s136 + $0x20] sm:$0xff] %v1284
        %1301 = vst [vmem:[%s136 + $0x28] sm:$0xff] %v1285
        %1302 = vst [vmem:[%s136 + $0x30] sm:$0xff] %v1286
        %1303 = vst [vmem:[%s136 + $0x38] sm:$0xff] %v1287
        %1304 = vst [vmem:[%s136 + $0x40] sm:$0xff] %v1288
        %1305 = vst [vmem:[%s136 + $0x48] sm:$0xff] %v1289
        %1306 = vst [vmem:[%s136 + $0x50] sm:$0xff] %v1290
        %1307 = vst [vmem:[%s136 + $0x58] sm:$0xff] %v1291
        %1308 = vst [vmem:[%s136 + $0x60] sm:$0xff] %v1292
        %1309 = vst [vmem:[%s136 + $0x68] sm:$0xff] %v1293
        %1310 = vst [vmem:[%s136 + $0x70] sm:$0xff] %v1294
        %1311 = vst [vmem:[%s136 + $0x78] sm:$0xff] %v1295
        %s1312 = sand.u32 %s81, 1
        %s1313 = scalar_lea.sflag [#allocation5], %s1312
        %s1314 = sand.u32 %s81, 1
        %s1315 = smul.addr %s1314, 128
        %s1316 = scalar_lea.vmem [#allocation4], %s1315
        // Predicated region
        $region51: #{tpu_custom_call.1} parent=27 // pred_check
          %p1317 = pneg %p91
        $region52: #{tpu_custom_call.1} parent=27 // pred_check_branch
          %1319 = sbr.rel (%p1317) target = $region54
        $region53: #{tpu_custom_call.1} parent=27 // pred_region
          %s1320 = smul.u32 8, %s22
          %1322 = vsyncadd %s1313, 0
          %s1323 = smul.addr %s1320, 2
          %s1324 = smul.addr %s21, 32
          %s1325 = sadd.s32 %s1323, %s1324
          %s1326 = smul.addr %s1325, 8
          %s1327 = scalar_lea.hbm %s3, %s1326
          %s1328 = sshll.u32 %s1316, 4
          %s1329 = int_to_ptr.vmem [resolvable:$true] %s1328
          %s1330 = sshll.u32 %s1327, 4
          %s1331 = int_to_ptr.hbm [resolvable:$true] %s1330
          %1336 = dma.vmem_to_hbm [thread:$0]  %s1329, 2048, %s1331, %s1313, 128, 128, 8
        $region54: #{tpu_custom_call.1} parent=27 // pred_fallthru
          _
      $region28: #{tpu_custom_call.1} parent=5 // pred_fallthru
        _
      %p1337 = scmp.le.s32.totalorder 2, %s12
      // Predicated region
      $region55: #{tpu_custom_call.1} parent=5 // pred_check
        %p1338 = pneg %p1337
      $region56: #{tpu_custom_call.1} parent=5 // pred_check_branch
        %1340 = sbr.rel (%p1338) target = $region58
      $region57: #{tpu_custom_call.1} parent=5 // pred_region
        %s1341 = ssub.s32 %s12, 2
        // Predicated region
        $region59: #{tpu_custom_call.1} parent=57 // pred_check
          %p1342 = pneg %p97
        $region60: #{tpu_custom_call.1} parent=57 // pred_check_branch
          %1344 = sbr.rel (%p1342) target = $region62
        $region61: #{tpu_custom_call.1} parent=57 // pred_region
          %s1345 = sand.u32 %s82, 1
          %s1346 = scalar_lea.sflag [#allocation5], %s1345
          %s1347 = sand.u32 %s82, 1
          %s1348 = smul.addr %s1347, 128
          %s1349 = scalar_lea.vmem [#allocation4], %s1348
          %1351 = dma.done %s1346, 2048
        $region62: #{tpu_custom_call.1} parent=57 // pred_fallthru
          _
      $region58: #{tpu_custom_call.1} parent=5 // pred_fallthru
        _
    $region6: #{tpu_custom_call.1} parent=1 // loop_footer
      %s16 = sadd.s32 1, %s12
    $region7: #{tpu_custom_call.1} parent=1 // loop_footer_branch
      %11 = sbr.rel target = $region3
    $region8: #{tpu_custom_call.1} parent=1 // loop_exit
      _
    %1352 = vsyncpa [#allocation5], 1
    %s1353 = scalar_lea.sflag [#allocation5], 1
    %1354 = vsyncpa %s1353, 1
  %1355 = vsyncmov [#allocation3]
  %s1356 = vpop.sfrf %1355
  %p1357 = scmp.eq.s32.totalorder %s1356, 0
  %p1358 = pneg %p1357
  %1360 = shalt.err (%p1358)

</llo_original>
